<compile_context>
chip_gen: v6e
topology: v6e:2x2x1
jax: 0.10.0
libtpu: 0.0.40
codegen_flags: <defaults>
</compile_context>

<pallas_src>
import math
from functools import partial

import jax
import jax.numpy as jnp
from jax import lax
from jax.experimental import pallas as pl
from jax.experimental.pallas import tpu as pltpu

# ---- small synthetic config (same structure as GPTConfig, scaled down) ----
CONTEXT_LEN = 16
VOCAB = 256
NUM_LAYERS = 2
NUM_HEADS = 2
D_MODEL = 32
HEAD_DIM = D_MODEL // NUM_HEADS

_GELU_C = math.sqrt(2.0 / math.pi)


# ----------------------------- in-kernel helpers -----------------------------

def _layernorm(x, g, b, eps=1e-5):
    # two-pass (centered) variance in f32; rsqrt goes to the EUP.
    mean = jnp.mean(x, axis=-1, keepdims=True)
    xc = x - mean
    var = jnp.mean(xc * xc, axis=-1, keepdims=True)
    return xc * lax.rsqrt(var + eps) * g + b


def _gelu_tanh(x):
    # GPT-2 tanh-approx GELU, f32.
    return 0.5 * x * (1.0 + jnp.tanh(_GELU_C * (x + 0.044715 * x * x * x)))


# ----------------------------- fused GPT kernel -----------------------------

def gpt_kernel(x_ref,
               ln1g_ref, ln1b_ref,
               wq_ref, bq_ref, wk_ref, bk_ref, wv_ref, bv_ref,
               pw_ref, pb_ref,
               ln2g_ref, ln2b_ref,
               fcw_ref, fcb_ref, fc2w_ref, fc2b_ref,
               lnfg_ref, lnfb_ref, lmw_ref,
               o_ref, acc_ref, *, batch, seq, num_heads):
    """One grid step == one transformer block; last step also does ln_f+lm_head."""
    l = pl.program_id(0)

    @pl.when(l == 0)
    def _():
        acc_ref[...] = x_ref[...].astype(jnp.float32)   # residual stream, f32, VMEM-resident

    x = acc_ref[...]                                    # (M, D) f32, M = B*T
    M, D = x.shape
    hd = D // num_heads

    # ---- attention: LN1 -> per-head (batched over B) QKV/scores/PV -> proj -> +res
    h1 = _layernorm(x, ln1g_ref[...], ln1b_ref[...]).astype(jnp.bfloat16)

    row = lax.broadcasted_iota(jnp.int32, (seq, seq), 0)
    col = lax.broadcasted_iota(jnp.int32, (seq, seq), 1)
    causal = col <= row                                 # built once per layer

    attn = jnp.zeros((M, D), jnp.float32)
    for h in range(num_heads):                          # static unroll; weights are
        # per-head weight slabs come pre-split from the wrapper (leading-axis index,
        # no lane-offset slicing).  Q weights/bias already carry the 1/sqrt(hd) scale.
        q = (jnp.dot(h1, wq_ref[h], preferred_element_type=jnp.float32)
             + bq_ref[h]).reshape(batch, seq, hd)
        k = (jnp.dot(h1, wk_ref[h], preferred_element_type=jnp.float32)
             + bk_ref[h]).reshape(batch, seq, hd)
        v = (jnp.dot(h1, wv_ref[h], preferred_element_type=jnp.float32)
             + bv_ref[h]).reshape(batch, seq, hd)

        s = jnp.einsum('bqd,bkd->bqk', q.astype(jnp.bfloat16), k.astype(jnp.bfloat16),
                       preferred_element_type=jnp.float32)        # (B, T, T) f32
        s = jnp.where(causal, s, -1e30)                 # large finite negative (NaN-safe)
        s = s - jnp.max(s, axis=-1, keepdims=True)
        p = jnp.exp(s)
        p = p * pl.reciprocal(jnp.sum(p, axis=-1, keepdims=True), approx=True)

        y = jnp.einsum('bqk,bkd->bqd', p.astype(jnp.bfloat16), v.astype(jnp.bfloat16),
                       preferred_element_type=jnp.float32)        # (B, T, hd)
        # accumulate through the per-head output projection (== concat + proj)
        attn = attn + jnp.dot(y.reshape(M, hd).astype(jnp.bfloat16), pw_ref[h],
                              preferred_element_type=jnp.float32)

    x1 = x + attn + pb_ref[...]                         # fused residual add

    # ---- MLP: LN2 -> c_fc -> GELU(tanh) -> c_proj -> +res
    h2 = _layernorm(x1, ln2g_ref[...], ln2b_ref[...]).astype(jnp.bfloat16)
    a = _gelu_tanh(jnp.dot(h2, fcw_ref[...], preferred_element_type=jnp.float32)
                   + fcb_ref[...])                      # (M, 4D) f32
    x2 = x1 + jnp.dot(a.astype(jnp.bfloat16), fc2w_ref[...],
                      preferred_element_type=jnp.float32) + fc2b_ref[...]
    acc_ref[...] = x2                                   # carry residual to next layer

    # ---- final LayerNorm + lm_head fused into the last layer's grid step
    @pl.when(l == pl.num_programs(0) - 1)
    def _():
        hf = _layernorm(x2, lnfg_ref[...], lnfb_ref[...]).astype(jnp.bfloat16)
        o_ref[...] = jnp.dot(hf, lmw_ref[...], preferred_element_type=jnp.float32)


# ----------------------------- wrapper -----------------------------

def gpt_pallas_forward(packed, x2d, *, batch, seq):
    M, D = x2d.shape
    V = packed["lm_w"].shape[1]
    L = packed["ln1_g"].shape[0]
    H = NUM_HEADS
    hd = D // H
    D4 = 4 * D

    def per_layer(shape):
        # leading L axis squeezed out; index_map streams layer l's slab.
        return pl.BlockSpec((None,) + shape, lambda l: (l,) + (0,) * len(shape))

    def shared(shape):
        return pl.BlockSpec(shape, lambda l: (0,) * len(shape))

    in_specs = [
        shared((M, D)),                                   # x (embeddings), DMA'd once
        per_layer((1, D)), per_layer((1, D)),             # ln1 g, b
        per_layer((H, D, hd)), per_layer((H, 1, hd)),     # wq, bq (pre-scaled)
        per_layer((H, D, hd)), per_layer((H, 1, hd)),     # wk, bk
        per_layer((H, D, hd)), per_layer((H, 1, hd)),     # wv, bv
        per_layer((H, hd, D)), per_layer((1, D)),         # attn proj w, b
        per_layer((1, D)), per_layer((1, D)),             # ln2 g, b
        per_layer((D, D4)), per_layer((1, D4)),           # c_fc w, b
        per_layer((D4, D)), per_layer((1, D)),            # mlp c_proj w, b
        shared((1, D)), shared((1, D)),                   # ln_f g, b
        shared((D, V)),                                   # lm_head (no bias)
    ]

    return pl.pallas_call(
        partial(gpt_kernel, batch=batch, seq=seq, num_heads=H),
        out_shape=jax.ShapeDtypeStruct((M, V), jnp.float32),
        grid=(L,),
        in_specs=in_specs,
        out_specs=shared((M, V)),                         # lane-dense logits, resident over L
        scratch_shapes=[pltpu.VMEM((M, D), jnp.float32)],  # residual stream
        compiler_params=pltpu.CompilerParams(
            dimension_semantics=("arbitrary",),            # layer axis carries state
            vmem_limit_bytes=32 * 1024 * 1024),
    )(x2d,
      packed["ln1_g"], packed["ln1_b"],
      packed["wq"], packed["bq"], packed["wk"], packed["bk"],
      packed["wv"], packed["bv"],
      packed["proj_w"], packed["proj_b"],
      packed["ln2_g"], packed["ln2_b"],
      packed["fc_w"], packed["fc_b"], packed["fc2_w"], packed["fc2_b"],
      packed["lnf_g"], packed["lnf_b"], packed["lm_w"])


# ----------------------------- params (natural GPT layout) -----------------------------

def init_params(key):
    std = 0.02
    f32 = jnp.float32
    keys = jax.random.split(key, 3 + NUM_LAYERS)
    params = {
        "wte": jax.random.normal(keys[0], (VOCAB, D_MODEL), f32) * std,
        "wpe": jax.random.normal(keys[1], (CONTEXT_LEN, D_MODEL), f32) * std,
        "lnf_g": jnp.ones((1, D_MODEL), f32),
        "lnf_b": jnp.zeros((1, D_MODEL), f32),
        "lm_head": jax.random.normal(keys[2], (D_MODEL, VOCAB), f32) * std,
        "blocks": [],
    }
    for l in range(NUM_LAYERS):
        kb = jax.random.split(keys[3 + l], 8)
        params["blocks"].append(dict(
            ln1_g=jnp.ones((1, D_MODEL), f32),
            ln1_b=jnp.zeros((1, D_MODEL), f32),
            attn_w=jax.random.normal(kb[0], (D_MODEL, 3 * D_MODEL), f32) * std,
            attn_b=jax.random.normal(kb[1], (1, 3 * D_MODEL), f32) * std,
            proj_w=jax.random.normal(kb[2], (D_MODEL, D_MODEL), f32) * std,
            proj_b=jax.random.normal(kb[3], (1, D_MODEL), f32) * std,
            ln2_g=jnp.ones((1, D_MODEL), f32),
            ln2_b=jnp.zeros((1, D_MODEL), f32),
            fc_w=jax.random.normal(kb[4], (D_MODEL, 4 * D_MODEL), f32) * std,
            fc_b=jax.random.normal(kb[5], (1, 4 * D_MODEL), f32) * std,
            fc2_w=jax.random.normal(kb[6], (4 * D_MODEL, D_MODEL), f32) * std,
            fc2_b=jax.random.normal(kb[7], (1, D_MODEL), f32) * std,
        ))
    return params


def pack_params(params):
    """Layout plumbing done once outside the kernel:
       - split c_attn into head-major per-head Q/K/V weights (no in-kernel lane slicing)
       - fold 1/sqrt(head_dim) into the Q projection
       - reshape attn c_proj to (H, hd, D) so per-head outputs accumulate (no lane concat)
       - stack every layer along a leading L axis (one pallas_call runs all blocks)
       - matmul weights bf16; biases / LN params f32."""
    D, H = D_MODEL, NUM_HEADS
    hd = D // H
    scale = 1.0 / math.sqrt(hd)
    bf16 = jnp.bfloat16

    def stack(fn, dtype=None):
        arr = jnp.stack([fn(b) for b in params["blocks"]], axis=0)
        return arr.astype(dtype) if dtype is not None else arr

    def head_w(w):   # (D, D) -> (H, D, hd)
        return w.reshape(D, H, hd).transpose(1, 0, 2)

    def head_b(b):   # (1, D) -> (H, 1, hd)
        return b.reshape(H, hd)[:, None, :]

    return dict(
        ln1_g=stack(lambda b: b["ln1_g"]),
        ln1_b=stack(lambda b: b["ln1_b"]),
        wq=stack(lambda b: head_w(b["attn_w"][:, 0 * D:1 * D] * scale), bf16),
        bq=stack(lambda b: head_b(b["attn_b"][:, 0 * D:1 * D] * scale)),
        wk=stack(lambda b: head_w(b["attn_w"][:, 1 * D:2 * D]), bf16),
        bk=stack(lambda b: head_b(b["attn_b"][:, 1 * D:2 * D])),
        wv=stack(lambda b: head_w(b["attn_w"][:, 2 * D:3 * D]), bf16),
        bv=stack(lambda b: head_b(b["attn_b"][:, 2 * D:3 * D])),
        proj_w=stack(lambda b: b["proj_w"].reshape(H, hd, D), bf16),
        proj_b=stack(lambda b: b["proj_b"]),
        ln2_g=stack(lambda b: b["ln2_g"]),
        ln2_b=stack(lambda b: b["ln2_b"]),
        fc_w=stack(lambda b: b["fc_w"], bf16),
        fc_b=stack(lambda b: b["fc_b"]),
        fc2_w=stack(lambda b: b["fc2_w"], bf16),
        fc2_b=stack(lambda b: b["fc2_b"]),
        lnf_g=params["lnf_g"],
        lnf_b=params["lnf_b"],
        lm_w=params["lm_head"].astype(bf16),
    )


# ----------------------------- model glue -----------------------------

def gpt_forward(packed, wte, wpe, idx):
    B, T = idx.shape
    assert T <= CONTEXT_LEN
    # token + position embedding gather stays in plain JAX glue (XLA gather)
    tok_emb = jnp.take(wte, idx, axis=0)                 # (B, T, D)
    x = (tok_emb + wpe[:T][None]).reshape(B * T, D_MODEL)  # fold batch into rows
    logits = gpt_pallas_forward(packed, x, batch=B, seq=T)
    return logits.reshape(B, T, VOCAB)


def reference_forward(params, idx):
    """Pure-JAX f32 reference matching the PyTorch module semantics."""
    B, T = idx.shape
    x = jnp.take(params["wte"], idx, axis=0) + params["wpe"][:T][None]

    def ln(x, g, b, eps=1e-5):
        mu = jnp.mean(x, -1, keepdims=True)
        var = jnp.var(x, -1, keepdims=True)
        return (x - mu) / jnp.sqrt(var + eps) * g + b

    for blk in params["blocks"]:
        h = ln(x, blk["ln1_g"], blk["ln1_b"])
        qkv = h @ blk["attn_w"] + blk["attn_b"]
        q, k, v = jnp.split(qkv, 3, axis=-1)
        q = q.reshape(B, T, NUM_HEADS, HEAD_DIM).transpose(0, 2, 1, 3)
        k = k.reshape(B, T, NUM_HEADS, HEAD_DIM).transpose(0, 2, 1, 3)
        v = v.reshape(B, T, NUM_HEADS, HEAD_DIM).transpose(0, 2, 1, 3)
        att = (q @ jnp.swapaxes(k, -1, -2)) * (1.0 / math.sqrt(HEAD_DIM))
        mask = jnp.tril(jnp.ones((T, T), bool))
        att = jnp.where(mask, att, -jnp.inf)
        att = jax.nn.softmax(att, axis=-1)
        y = (att @ v).transpose(0, 2, 1, 3).reshape(B, T, D_MODEL)
        x = x + y @ blk["proj_w"] + blk["proj_b"]
        h2 = ln(x, blk["ln2_g"], blk["ln2_b"])
        a = jax.nn.gelu(h2 @ blk["fc_w"] + blk["fc_b"], approximate=True)
        x = x + a @ blk["fc2_w"] + blk["fc2_b"]
    x = ln(x, params["lnf_g"], params["lnf_b"])
    return x @ params["lm_head"]


if __name__ == "__main__":
    key = jax.random.PRNGKey(0)
    pkey, ikey = jax.random.split(key)
    params = init_params(pkey)
    packed = pack_params(params)

    B, T = 2, 8
    idx = jax.random.randint(ikey, (B, T), 0, VOCAB, dtype=jnp.int32)

    logits = jax.jit(gpt_forward)(packed, params["wte"], params["wpe"], idx)
    jax.block_until_ready(logits)

    assert logits.shape == (B, T, VOCAB)
    assert logits.dtype == jnp.float32
    assert bool(jnp.all(jnp.isfinite(logits)))

    # tolerance-asserted pure-JAX reference (bf16 weights / approx reciprocal => loose tol)
    ref = reference_forward(params, idx)
    assert float(jnp.max(jnp.abs(logits - ref))) < 5e-2

    print("KERNEL_OK")
</pallas_src>

<mosaic_0001>
module attributes {stable_mosaic.version = 11 : i64} {
  func.func @gpt_kernel(%arg0: i32, %arg1: memref<16x32xf32, #tpu.memory_space<vmem>>, %arg2: memref<1x1x32xf32, #tpu.memory_space<vmem>>, %arg3: memref<1x1x32xf32, #tpu.memory_space<vmem>>, %arg4: memref<1x2x32x16xbf16, #tpu.memory_space<vmem>>, %arg5: memref<1x2x1x16xf32, #tpu.memory_space<vmem>>, %arg6: memref<1x2x32x16xbf16, #tpu.memory_space<vmem>>, %arg7: memref<1x2x1x16xf32, #tpu.memory_space<vmem>>, %arg8: memref<1x2x32x16xbf16, #tpu.memory_space<vmem>>, %arg9: memref<1x2x1x16xf32, #tpu.memory_space<vmem>>, %arg10: memref<1x2x16x32xbf16, #tpu.memory_space<vmem>>, %arg11: memref<1x1x32xf32, #tpu.memory_space<vmem>>, %arg12: memref<1x1x32xf32, #tpu.memory_space<vmem>>, %arg13: memref<1x1x32xf32, #tpu.memory_space<vmem>>, %arg14: memref<1x32x128xbf16, #tpu.memory_space<vmem>>, %arg15: memref<1x1x128xf32, #tpu.memory_space<vmem>>, %arg16: memref<1x128x32xbf16, #tpu.memory_space<vmem>>, %arg17: memref<1x1x32xf32, #tpu.memory_space<vmem>>, %arg18: memref<1x32xf32, #tpu.memory_space<vmem>>, %arg19: memref<1x32xf32, #tpu.memory_space<vmem>>, %arg20: memref<32x256xbf16, #tpu.memory_space<vmem>>, %arg21: memref<16x256xf32, #tpu.memory_space<vmem>>, %arg22: memref<16x32xf32, #tpu.memory_space<vmem>>) attributes {dimension_semantics = [#tpu.dimension_semantics<arbitrary>], iteration_bounds = array<i64: 2>, scalar_prefetch = 0 : i64, scratch_operands = 1 : i64, tpu.core_type = #tpu.core_type<tc>, window_params = [{pipeline_mode = #tpu.pipeline_mode<synchronous>, transform_indices = @transform_0, window_bounds = array<i64: 16, 32>}, {transform_indices = @transform_1, window_bounds = array<i64: 1, 1, 32>}, {transform_indices = @transform_2, window_bounds = array<i64: 1, 1, 32>}, {transform_indices = @transform_3, window_bounds = array<i64: 1, 2, 32, 16>}, {transform_indices = @transform_4, window_bounds = array<i64: 1, 2, 1, 16>}, {transform_indices = @transform_5, window_bounds = array<i64: 1, 2, 32, 16>}, {transform_indices = @transform_6, window_bounds = array<i64: 1, 2, 1, 16>}, {transform_indices = @transform_7, window_bounds = array<i64: 1, 2, 32, 16>}, {transform_indices = @transform_8, window_bounds = array<i64: 1, 2, 1, 16>}, {transform_indices = @transform_9, window_bounds = array<i64: 1, 2, 16, 32>}, {transform_indices = @transform_10, window_bounds = array<i64: 1, 1, 32>}, {transform_indices = @transform_11, window_bounds = array<i64: 1, 1, 32>}, {transform_indices = @transform_12, window_bounds = array<i64: 1, 1, 32>}, {transform_indices = @transform_13, window_bounds = array<i64: 1, 32, 128>}, {transform_indices = @transform_14, window_bounds = array<i64: 1, 1, 128>}, {transform_indices = @transform_15, window_bounds = array<i64: 1, 128, 32>}, {transform_indices = @transform_16, window_bounds = array<i64: 1, 1, 32>}, {pipeline_mode = #tpu.pipeline_mode<synchronous>, transform_indices = @transform_17, window_bounds = array<i64: 1, 32>}, {pipeline_mode = #tpu.pipeline_mode<synchronous>, transform_indices = @transform_18, window_bounds = array<i64: 1, 32>}, {pipeline_mode = #tpu.pipeline_mode<synchronous>, transform_indices = @transform_19, window_bounds = array<i64: 32, 256>}, {pipeline_mode = #tpu.pipeline_mode<synchronous>, transform_indices = @transform_20, window_bounds = array<i64: 16, 256>}]} {
    %c0_i32 = arith.constant 0 : i32
    %0 = arith.cmpi eq, %arg0, %c0_i32 : i32
    %1 = arith.extui %0 : i1 to i32
    %c0_i32_0 = arith.constant 0 : i32
    %2 = arith.cmpi ne, %1, %c0_i32_0 : i32
    scf.if %2 {
      %c0_121 = arith.constant 0 : index
      %c0_122 = arith.constant 0 : index
      %196 = vector.load %arg1[%c0_121, %c0_122] : memref<16x32xf32, #tpu.memory_space<vmem>>, vector<16x32xf32>
      %c0_123 = arith.constant 0 : index
      %c0_124 = arith.constant 0 : index
      %197 = vector.load %arg22[%c0_123, %c0_124] : memref<16x32xf32, #tpu.memory_space<vmem>>, vector<16x32xf32>
      tpu.vector_store %arg22[%c0_123, %c0_124], %196 {strides = array<i32>} : memref<16x32xf32, #tpu.memory_space<vmem>>, vector<16x32xf32>,
    } else {
    }
    %c0 = arith.constant 0 : index
    %c0_1 = arith.constant 0 : index
    %3 = vector.load %arg22[%c0, %c0_1] : memref<16x32xf32, #tpu.memory_space<vmem>>, vector<16x32xf32>
    %c0_2 = arith.constant 0 : index
    %c0_3 = arith.constant 0 : index
    %c0_4 = arith.constant 0 : index
    %4 = vector.load %arg2[%c0_2, %c0_3, %c0_4] : memref<1x1x32xf32, #tpu.memory_space<vmem>>, vector<1x1x32xf32>
    %5 = vector.shape_cast %4 : vector<1x1x32xf32> to vector<1x32xf32>
    %c0_5 = arith.constant 0 : index
    %c0_6 = arith.constant 0 : index
    %c0_7 = arith.constant 0 : index
    %6 = vector.load %arg3[%c0_5, %c0_6, %c0_7] : memref<1x1x32xf32, #tpu.memory_space<vmem>>, vector<1x1x32xf32>
    %7 = vector.shape_cast %6 : vector<1x1x32xf32> to vector<1x32xf32>
    %cst = arith.constant dense<0.000000e+00> : vector<16xf32>
    %8 = vector.multi_reduction <add>, %3, %cst [1] : vector<16x32xf32> to vector<16xf32>
    %9 = vector.shape_cast %8 : vector<16xf32> to vector<16x1xf32>
    %cst_8 = arith.constant 3.200000e+01 : f32
    %10 = vector.broadcast %cst_8 : f32 to vector<16x1xf32>
    %11 = arith.divf %9, %10 : vector<16x1xf32>
    %12 = vector.broadcast %11 : vector<16x1xf32> to vector<16x32xf32>
    %13 = arith.subf %3, %12 : vector<16x32xf32>
    %14 = arith.mulf %13, %13 : vector<16x32xf32>
    %cst_9 = arith.constant dense<0.000000e+00> : vector<16xf32>
    %15 = vector.multi_reduction <add>, %14, %cst_9 [1] : vector<16x32xf32> to vector<16xf32>
    %16 = vector.shape_cast %15 : vector<16xf32> to vector<16x1xf32>
    %cst_10 = arith.constant 3.200000e+01 : f32
    %17 = vector.broadcast %cst_10 : f32 to vector<16x1xf32>
    %18 = arith.divf %16, %17 : vector<16x1xf32>
    %cst_11 = arith.constant 9.99999974E-6 : f32
    %19 = vector.broadcast %cst_11 : f32 to vector<16x1xf32>
    %20 = arith.addf %18, %19 : vector<16x1xf32>
    %21 = math.rsqrt %20 : vector<16x1xf32>
    %22 = vector.broadcast %21 : vector<16x1xf32> to vector<16x32xf32>
    %23 = arith.mulf %13, %22 : vector<16x32xf32>
    %24 = vector.broadcast %5 : vector<1x32xf32> to vector<16x32xf32>
    %25 = arith.mulf %23, %24 : vector<16x32xf32>
    %26 = vector.broadcast %7 : vector<1x32xf32> to vector<16x32xf32>
    %27 = arith.addf %25, %26 : vector<16x32xf32>
    %28 = arith.truncf %27 : vector<16x32xf32> to vector<16x32xbf16>
    %29 = tpu.iota {dimensions = array<i32: 0>} : vector<8x8xi32>
    %30 = tpu.iota {dimensions = array<i32: 1>} : vector<8x8xi32>
    %31 = arith.cmpi sle, %30, %29 : vector<8x8xi32>
    %cst_12 = arith.constant 0.000000e+00 : f32
    %32 = vector.broadcast %cst_12 : f32 to vector<16x32xf32>
    %c0_13 = arith.constant 0 : index
    %c0_14 = arith.constant 0 : index
    %c0_15 = arith.constant 0 : index
    %c0_16 = arith.constant 0 : index
    %33 = vector.load %arg4[%c0_13, %c0_14, %c0_15, %c0_16] : memref<1x2x32x16xbf16, #tpu.memory_space<vmem>>, vector<1x1x32x16xbf16>
    %34 = vector.shape_cast %33 : vector<1x1x32x16xbf16> to vector<32x16xbf16>
    %cst_17 = arith.constant dense<0.000000e+00> : vector<16x16xf32>
    %35 = tpu.matmul %28, %34, %cst_17 {dimension_numbers = #tpu.dot_dimension_numbers<[1], [0], [0], [1], [0, 0, 1, 1], [], []>} : vector<16x32xbf16>, vector<32x16xbf16>, vector<16x16xf32> -> vector<16x16xf32>
    %c0_18 = arith.constant 0 : index
    %c0_19 = arith.constant 0 : index
    %c0_20 = arith.constant 0 : index
    %c0_21 = arith.constant 0 : index
    %36 = vector.load %arg5[%c0_18, %c0_19, %c0_20, %c0_21] : memref<1x2x1x16xf32, #tpu.memory_space<vmem>>, vector<1x1x1x16xf32>
    %37 = vector.shape_cast %36 : vector<1x1x1x16xf32> to vector<1x16xf32>
    %38 = vector.broadcast %37 : vector<1x16xf32> to vector<16x16xf32>
    %39 = arith.addf %35, %38 : vector<16x16xf32>
    %40 = vector.shape_cast %39 : vector<16x16xf32> to vector<2x8x16xf32>
    %c0_22 = arith.constant 0 : index
    %c0_23 = arith.constant 0 : index
    %c0_24 = arith.constant 0 : index
    %c0_25 = arith.constant 0 : index
    %41 = vector.load %arg6[%c0_22, %c0_23, %c0_24, %c0_25] : memref<1x2x32x16xbf16, #tpu.memory_space<vmem>>, vector<1x1x32x16xbf16>
    %42 = vector.shape_cast %41 : vector<1x1x32x16xbf16> to vector<32x16xbf16>
    %cst_26 = arith.constant dense<0.000000e+00> : vector<16x16xf32>
    %43 = tpu.matmul %28, %42, %cst_26 {dimension_numbers = #tpu.dot_dimension_numbers<[1], [0], [0], [1], [0, 0, 1, 1], [], []>} : vector<16x32xbf16>, vector<32x16xbf16>, vector<16x16xf32> -> vector<16x16xf32>
    %c0_27 = arith.constant 0 : index
    %c0_28 = arith.constant 0 : index
    %c0_29 = arith.constant 0 : index
    %c0_30 = arith.constant 0 : index
    %44 = vector.load %arg7[%c0_27, %c0_28, %c0_29, %c0_30] : memref<1x2x1x16xf32, #tpu.memory_space<vmem>>, vector<1x1x1x16xf32>
    %45 = vector.shape_cast %44 : vector<1x1x1x16xf32> to vector<1x16xf32>
    %46 = vector.broadcast %45 : vector<1x16xf32> to vector<16x16xf32>
    %47 = arith.addf %43, %46 : vector<16x16xf32>
    %48 = vector.shape_cast %47 : vector<16x16xf32> to vector<2x8x16xf32>
    %c0_31 = arith.constant 0 : index
    %c0_32 = arith.constant 0 : index
    %c0_33 = arith.constant 0 : index
    %c0_34 = arith.constant 0 : index
    %49 = vector.load %arg8[%c0_31, %c0_32, %c0_33, %c0_34] : memref<1x2x32x16xbf16, #tpu.memory_space<vmem>>, vector<1x1x32x16xbf16>
    %50 = vector.shape_cast %49 : vector<1x1x32x16xbf16> to vector<32x16xbf16>
    %cst_35 = arith.constant dense<0.000000e+00> : vector<16x16xf32>
    %51 = tpu.matmul %28, %50, %cst_35 {dimension_numbers = #tpu.dot_dimension_numbers<[1], [0], [0], [1], [0, 0, 1, 1], [], []>} : vector<16x32xbf16>, vector<32x16xbf16>, vector<16x16xf32> -> vector<16x16xf32>
    %c0_36 = arith.constant 0 : index
    %c0_37 = arith.constant 0 : index
    %c0_38 = arith.constant 0 : index
    %c0_39 = arith.constant 0 : index
    %52 = vector.load %arg9[%c0_36, %c0_37, %c0_38, %c0_39] : memref<1x2x1x16xf32, #tpu.memory_space<vmem>>, vector<1x1x1x16xf32>
    %53 = vector.shape_cast %52 : vector<1x1x1x16xf32> to vector<1x16xf32>
    %54 = vector.broadcast %53 : vector<1x16xf32> to vector<16x16xf32>
    %55 = arith.addf %51, %54 : vector<16x16xf32>
    %56 = vector.shape_cast %55 : vector<16x16xf32> to vector<2x8x16xf32>
    %57 = arith.truncf %40 : vector<2x8x16xf32> to vector<2x8x16xbf16>
    %58 = arith.truncf %48 : vector<2x8x16xf32> to vector<2x8x16xbf16>
    "tpu.trace_start"() <{level = 10 : i32, message = "bqd,bkd->bqk"}> : () -> ()
    %cst_40 = arith.constant dense<0.000000e+00> : vector<2x8x8xf32>
    %59 = tpu.matmul %57, %58, %cst_40 {dimension_numbers = #tpu.dot_dimension_numbers<[2], [2], [1], [1], [0, 0, 0, 1, 1, 1], [0], [0]>} : vector<2x8x16xbf16>, vector<2x8x16xbf16>, vector<2x8x8xf32> -> vector<2x8x8xf32>
    %cst_41 = arith.constant -1.000000e+30 : f32
    "tpu.trace_stop"() : () -> ()
    %60 = vector.shape_cast %31 : vector<8x8xi1> to vector<1x8x8xi1>
    %61 = vector.broadcast %60 : vector<1x8x8xi1> to vector<2x8x8xi1>
    %62 = vector.broadcast %cst_41 : f32 to vector<2x8x8xf32>
    %63 = arith.select %61, %59, %62 : vector<2x8x8xi1>, vector<2x8x8xf32>
    %cst_42 = arith.constant dense<0xFF800000> : vector<2x8xf32>
    %64 = vector.multi_reduction <maximumf>, %63, %cst_42 [2] : vector<2x8x8xf32> to vector<2x8xf32>
    %65 = vector.shape_cast %64 : vector<2x8xf32> to vector<2x8x1xf32>
    %66 = vector.broadcast %65 : vector<2x8x1xf32> to vector<2x8x8xf32>
    %67 = arith.subf %63, %66 : vector<2x8x8xf32>
    %68 = math.exp %67 : vector<2x8x8xf32>
    %cst_43 = arith.constant dense<0.000000e+00> : vector<2x8xf32>
    %69 = vector.multi_reduction <add>, %68, %cst_43 [2] : vector<2x8x8xf32> to vector<2x8xf32>
    %70 = vector.shape_cast %69 : vector<2x8xf32> to vector<2x8x1xf32>
    %71 = tpu.reciprocal %70 {approx = true} : vector<2x8x1xf32> -> vector<2x8x1xf32>
    %72 = vector.broadcast %71 : vector<2x8x1xf32> to vector<2x8x8xf32>
    %73 = arith.mulf %68, %72 : vector<2x8x8xf32>
    %74 = arith.truncf %73 : vector<2x8x8xf32> to vector<2x8x8xbf16>
    %75 = arith.truncf %56 : vector<2x8x16xf32> to vector<2x8x16xbf16>
    "tpu.trace_start"() <{level = 10 : i32, message = "bqk,bkd->bqd"}> : () -> ()
    %cst_44 = arith.constant dense<0.000000e+00> : vector<2x8x16xf32>
    %76 = tpu.matmul %74, %75, %cst_44 {dimension_numbers = #tpu.dot_dimension_numbers<[2], [1], [1], [2], [0, 0, 0, 1, 1, 2], [0], [0]>} : vector<2x8x8xbf16>, vector<2x8x16xbf16>, vector<2x8x16xf32> -> vector<2x8x16xf32>
    "tpu.trace_stop"() : () -> ()
    %77 = vector.shape_cast %76 : vector<2x8x16xf32> to vector<16x16xf32>
    %78 = arith.truncf %77 : vector<16x16xf32> to vector<16x16xbf16>
    %c0_45 = arith.constant 0 : index
    %c0_46 = arith.constant 0 : index
    %c0_47 = arith.constant 0 : index
    %c0_48 = arith.constant 0 : index
    %79 = vector.load %arg10[%c0_45, %c0_46, %c0_47, %c0_48] : memref<1x2x16x32xbf16, #tpu.memory_space<vmem>>, vector<1x1x16x32xbf16>
    %80 = vector.shape_cast %79 : vector<1x1x16x32xbf16> to vector<16x32xbf16>
    %cst_49 = arith.constant dense<0.000000e+00> : vector<16x32xf32>
    %81 = tpu.matmul %78, %80, %cst_49 {dimension_numbers = #tpu.dot_dimension_numbers<[1], [0], [0], [1], [0, 0, 1, 1], [], []>} : vector<16x16xbf16>, vector<16x32xbf16>, vector<16x32xf32> -> vector<16x32xf32>
    %82 = arith.addf %32, %81 : vector<16x32xf32>
    %c0_50 = arith.constant 0 : index
    %c1 = arith.constant 1 : index
    %c0_51 = arith.constant 0 : index
    %c0_52 = arith.constant 0 : index
    %83 = vector.load %arg4[%c0_50, %c1, %c0_51, %c0_52] : memref<1x2x32x16xbf16, #tpu.memory_space<vmem>>, vector<1x1x32x16xbf16>
    %84 = vector.shape_cast %83 : vector<1x1x32x16xbf16> to vector<32x16xbf16>
    %cst_53 = arith.constant dense<0.000000e+00> : vector<16x16xf32>
    %85 = tpu.matmul %28, %84, %cst_53 {dimension_numbers = #tpu.dot_dimension_numbers<[1], [0], [0], [1], [0, 0, 1, 1], [], []>} : vector<16x32xbf16>, vector<32x16xbf16>, vector<16x16xf32> -> vector<16x16xf32>
    %c0_54 = arith.constant 0 : index
    %c1_55 = arith.constant 1 : index
    %c0_56 = arith.constant 0 : index
    %c0_57 = arith.constant 0 : index
    %86 = vector.load %arg5[%c0_54, %c1_55, %c0_56, %c0_57] : memref<1x2x1x16xf32, #tpu.memory_space<vmem>>, vector<1x1x1x16xf32>
    %87 = vector.shape_cast %86 : vector<1x1x1x16xf32> to vector<1x16xf32>
    %88 = vector.broadcast %87 : vector<1x16xf32> to vector<16x16xf32>
    %89 = arith.addf %85, %88 : vector<16x16xf32>
    %90 = vector.shape_cast %89 : vector<16x16xf32> to vector<2x8x16xf32>
    %c0_58 = arith.constant 0 : index
    %c1_59 = arith.constant 1 : index
    %c0_60 = arith.constant 0 : index
    %c0_61 = arith.constant 0 : index
    %91 = vector.load %arg6[%c0_58, %c1_59, %c0_60, %c0_61] : memref<1x2x32x16xbf16, #tpu.memory_space<vmem>>, vector<1x1x32x16xbf16>
    %92 = vector.shape_cast %91 : vector<1x1x32x16xbf16> to vector<32x16xbf16>
    %cst_62 = arith.constant dense<0.000000e+00> : vector<16x16xf32>
    %93 = tpu.matmul %28, %92, %cst_62 {dimension_numbers = #tpu.dot_dimension_numbers<[1], [0], [0], [1], [0, 0, 1, 1], [], []>} : vector<16x32xbf16>, vector<32x16xbf16>, vector<16x16xf32> -> vector<16x16xf32>
    %c0_63 = arith.constant 0 : index
    %c1_64 = arith.constant 1 : index
    %c0_65 = arith.constant 0 : index
    %c0_66 = arith.constant 0 : index
    %94 = vector.load %arg7[%c0_63, %c1_64, %c0_65, %c0_66] : memref<1x2x1x16xf32, #tpu.memory_space<vmem>>, vector<1x1x1x16xf32>
    %95 = vector.shape_cast %94 : vector<1x1x1x16xf32> to vector<1x16xf32>
    %96 = vector.broadcast %95 : vector<1x16xf32> to vector<16x16xf32>
    %97 = arith.addf %93, %96 : vector<16x16xf32>
    %98 = vector.shape_cast %97 : vector<16x16xf32> to vector<2x8x16xf32>
    %c0_67 = arith.constant 0 : index
    %c1_68 = arith.constant 1 : index
    %c0_69 = arith.constant 0 : index
    %c0_70 = arith.constant 0 : index
    %99 = vector.load %arg8[%c0_67, %c1_68, %c0_69, %c0_70] : memref<1x2x32x16xbf16, #tpu.memory_space<vmem>>, vector<1x1x32x16xbf16>
    %100 = vector.shape_cast %99 : vector<1x1x32x16xbf16> to vector<32x16xbf16>
    %cst_71 = arith.constant dense<0.000000e+00> : vector<16x16xf32>
    %101 = tpu.matmul %28, %100, %cst_71 {dimension_numbers = #tpu.dot_dimension_numbers<[1], [0], [0], [1], [0, 0, 1, 1], [], []>} : vector<16x32xbf16>, vector<32x16xbf16>, vector<16x16xf32> -> vector<16x16xf32>
    %c0_72 = arith.constant 0 : index
    %c1_73 = arith.constant 1 : index
    %c0_74 = arith.constant 0 : index
    %c0_75 = arith.constant 0 : index
    %102 = vector.load %arg9[%c0_72, %c1_73, %c0_74, %c0_75] : memref<1x2x1x16xf32, #tpu.memory_space<vmem>>, vector<1x1x1x16xf32>
    %103 = vector.shape_cast %102 : vector<1x1x1x16xf32> to vector<1x16xf32>
    %104 = vector.broadcast %103 : vector<1x16xf32> to vector<16x16xf32>
    %105 = arith.addf %101, %104 : vector<16x16xf32>
    %106 = vector.shape_cast %105 : vector<16x16xf32> to vector<2x8x16xf32>
    %107 = arith.truncf %90 : vector<2x8x16xf32> to vector<2x8x16xbf16>
    %108 = arith.truncf %98 : vector<2x8x16xf32> to vector<2x8x16xbf16>
    "tpu.trace_start"() <{level = 10 : i32, message = "bqd,bkd->bqk"}> : () -> ()
    %cst_76 = arith.constant dense<0.000000e+00> : vector<2x8x8xf32>
    %109 = tpu.matmul %107, %108, %cst_76 {dimension_numbers = #tpu.dot_dimension_numbers<[2], [2], [1], [1], [0, 0, 0, 1, 1, 1], [0], [0]>} : vector<2x8x16xbf16>, vector<2x8x16xbf16>, vector<2x8x8xf32> -> vector<2x8x8xf32>
    %cst_77 = arith.constant -1.000000e+30 : f32
    "tpu.trace_stop"() : () -> ()
    %110 = vector.shape_cast %31 : vector<8x8xi1> to vector<1x8x8xi1>
    %111 = vector.broadcast %110 : vector<1x8x8xi1> to vector<2x8x8xi1>
    %112 = vector.broadcast %cst_77 : f32 to vector<2x8x8xf32>
    %113 = arith.select %111, %109, %112 : vector<2x8x8xi1>, vector<2x8x8xf32>
    %cst_78 = arith.constant dense<0xFF800000> : vector<2x8xf32>
    %114 = vector.multi_reduction <maximumf>, %113, %cst_78 [2] : vector<2x8x8xf32> to vector<2x8xf32>
    %115 = vector.shape_cast %114 : vector<2x8xf32> to vector<2x8x1xf32>
    %116 = vector.broadcast %115 : vector<2x8x1xf32> to vector<2x8x8xf32>
    %117 = arith.subf %113, %116 : vector<2x8x8xf32>
    %118 = math.exp %117 : vector<2x8x8xf32>
    %cst_79 = arith.constant dense<0.000000e+00> : vector<2x8xf32>
    %119 = vector.multi_reduction <add>, %118, %cst_79 [2] : vector<2x8x8xf32> to vector<2x8xf32>
    %120 = vector.shape_cast %119 : vector<2x8xf32> to vector<2x8x1xf32>
    %121 = tpu.reciprocal %120 {approx = true} : vector<2x8x1xf32> -> vector<2x8x1xf32>
    %122 = vector.broadcast %121 : vector<2x8x1xf32> to vector<2x8x8xf32>
    %123 = arith.mulf %118, %122 : vector<2x8x8xf32>
    %124 = arith.truncf %123 : vector<2x8x8xf32> to vector<2x8x8xbf16>
    %125 = arith.truncf %106 : vector<2x8x16xf32> to vector<2x8x16xbf16>
    "tpu.trace_start"() <{level = 10 : i32, message = "bqk,bkd->bqd"}> : () -> ()
    %cst_80 = arith.constant dense<0.000000e+00> : vector<2x8x16xf32>
    %126 = tpu.matmul %124, %125, %cst_80 {dimension_numbers = #tpu.dot_dimension_numbers<[2], [1], [1], [2], [0, 0, 0, 1, 1, 2], [0], [0]>} : vector<2x8x8xbf16>, vector<2x8x16xbf16>, vector<2x8x16xf32> -> vector<2x8x16xf32>
    "tpu.trace_stop"() : () -> ()
    %127 = vector.shape_cast %126 : vector<2x8x16xf32> to vector<16x16xf32>
    %128 = arith.truncf %127 : vector<16x16xf32> to vector<16x16xbf16>
    %c0_81 = arith.constant 0 : index
    %c1_82 = arith.constant 1 : index
    %c0_83 = arith.constant 0 : index
    %c0_84 = arith.constant 0 : index
    %129 = vector.load %arg10[%c0_81, %c1_82, %c0_83, %c0_84] : memref<1x2x16x32xbf16, #tpu.memory_space<vmem>>, vector<1x1x16x32xbf16>
    %130 = vector.shape_cast %129 : vector<1x1x16x32xbf16> to vector<16x32xbf16>
    %cst_85 = arith.constant dense<0.000000e+00> : vector<16x32xf32>
    %131 = tpu.matmul %128, %130, %cst_85 {dimension_numbers = #tpu.dot_dimension_numbers<[1], [0], [0], [1], [0, 0, 1, 1], [], []>} : vector<16x16xbf16>, vector<16x32xbf16>, vector<16x32xf32> -> vector<16x32xf32>
    %132 = arith.addf %82, %131 : vector<16x32xf32>
    %133 = arith.addf %3, %132 : vector<16x32xf32>
    %c0_86 = arith.constant 0 : index
    %c0_87 = arith.constant 0 : index
    %c0_88 = arith.constant 0 : index
    %134 = vector.load %arg11[%c0_86, %c0_87, %c0_88] : memref<1x1x32xf32, #tpu.memory_space<vmem>>, vector<1x1x32xf32>
    %135 = vector.shape_cast %134 : vector<1x1x32xf32> to vector<1x32xf32>
    %136 = vector.broadcast %135 : vector<1x32xf32> to vector<16x32xf32>
    %137 = arith.addf %133, %136 : vector<16x32xf32>
    %c0_89 = arith.constant 0 : index
    %c0_90 = arith.constant 0 : index
    %c0_91 = arith.constant 0 : index
    %138 = vector.load %arg12[%c0_89, %c0_90, %c0_91] : memref<1x1x32xf32, #tpu.memory_space<vmem>>, vector<1x1x32xf32>
    %139 = vector.shape_cast %138 : vector<1x1x32xf32> to vector<1x32xf32>
    %c0_92 = arith.constant 0 : index
    %c0_93 = arith.constant 0 : index
    %c0_94 = arith.constant 0 : index
    %140 = vector.load %arg13[%c0_92, %c0_93, %c0_94] : memref<1x1x32xf32, #tpu.memory_space<vmem>>, vector<1x1x32xf32>
    %141 = vector.shape_cast %140 : vector<1x1x32xf32> to vector<1x32xf32>
    %cst_95 = arith.constant dense<0.000000e+00> : vector<16xf32>
    %142 = vector.multi_reduction <add>, %137, %cst_95 [1] : vector<16x32xf32> to vector<16xf32>
    %143 = vector.shape_cast %142 : vector<16xf32> to vector<16x1xf32>
    %cst_96 = arith.constant 3.200000e+01 : f32
    %144 = vector.broadcast %cst_96 : f32 to vector<16x1xf32>
    %145 = arith.divf %143, %144 : vector<16x1xf32>
    %146 = vector.broadcast %145 : vector<16x1xf32> to vector<16x32xf32>
    %147 = arith.subf %137, %146 : vector<16x32xf32>
    %148 = arith.mulf %147, %147 : vector<16x32xf32>
    %cst_97 = arith.constant dense<0.000000e+00> : vector<16xf32>
    %149 = vector.multi_reduction <add>, %148, %cst_97 [1] : vector<16x32xf32> to vector<16xf32>
    %150 = vector.shape_cast %149 : vector<16xf32> to vector<16x1xf32>
    %cst_98 = arith.constant 3.200000e+01 : f32
    %151 = vector.broadcast %cst_98 : f32 to vector<16x1xf32>
    %152 = arith.divf %150, %151 : vector<16x1xf32>
    %cst_99 = arith.constant 9.99999974E-6 : f32
    %153 = vector.broadcast %cst_99 : f32 to vector<16x1xf32>
    %154 = arith.addf %152, %153 : vector<16x1xf32>
    %155 = math.rsqrt %154 : vector<16x1xf32>
    %156 = vector.broadcast %155 : vector<16x1xf32> to vector<16x32xf32>
    %157 = arith.mulf %147, %156 : vector<16x32xf32>
    %158 = vector.broadcast %139 : vector<1x32xf32> to vector<16x32xf32>
    %159 = arith.mulf %157, %158 : vector<16x32xf32>
    %160 = vector.broadcast %141 : vector<1x32xf32> to vector<16x32xf32>
    %161 = arith.addf %159, %160 : vector<16x32xf32>
    %162 = arith.truncf %161 : vector<16x32xf32> to vector<16x32xbf16>
    %c0_100 = arith.constant 0 : index
    %c0_101 = arith.constant 0 : index
    %c0_102 = arith.constant 0 : index
    %163 = vector.load %arg14[%c0_100, %c0_101, %c0_102] : memref<1x32x128xbf16, #tpu.memory_space<vmem>>, vector<1x32x128xbf16>
    %164 = vector.shape_cast %163 : vector<1x32x128xbf16> to vector<32x128xbf16>
    %cst_103 = arith.constant dense<0.000000e+00> : vector<16x128xf32>
    %165 = tpu.matmul %162, %164, %cst_103 {dimension_numbers = #tpu.dot_dimension_numbers<[1], [0], [0], [1], [0, 0, 1, 1], [], []>} : vector<16x32xbf16>, vector<32x128xbf16>, vector<16x128xf32> -> vector<16x128xf32>
    %c0_104 = arith.constant 0 : index
    %c0_105 = arith.constant 0 : index
    %c0_106 = arith.constant 0 : index
    %166 = vector.load %arg15[%c0_104, %c0_105, %c0_106] : memref<1x1x128xf32, #tpu.memory_space<vmem>>, vector<1x1x128xf32>
    %167 = vector.shape_cast %166 : vector<1x1x128xf32> to vector<1x128xf32>
    %168 = vector.broadcast %167 : vector<1x128xf32> to vector<16x128xf32>
    %169 = arith.addf %165, %168 : vector<16x128xf32>
    %cst_107 = arith.constant 5.000000e-01 : f32
    %170 = vector.broadcast %cst_107 : f32 to vector<16x128xf32>
    %171 = arith.mulf %170, %169 : vector<16x128xf32>
    %cst_108 = arith.constant 4.471500e-02 : f32
    %172 = vector.broadcast %cst_108 : f32 to vector<16x128xf32>
    %173 = arith.mulf %172, %169 : vector<16x128xf32>
    %174 = arith.mulf %173, %169 : vector<16x128xf32>
    %175 = arith.mulf %174, %169 : vector<16x128xf32>
    %176 = arith.addf %169, %175 : vector<16x128xf32>
    %cst_109 = arith.constant 0.797884583 : f32
    %177 = vector.broadcast %cst_109 : f32 to vector<16x128xf32>
    %178 = arith.mulf %177, %176 : vector<16x128xf32>
    %179 = math.tanh %178 : vector<16x128xf32>
    %cst_110 = arith.constant 1.000000e+00 : f32
    %180 = vector.broadcast %cst_110 : f32 to vector<16x128xf32>
    %181 = arith.addf %180, %179 : vector<16x128xf32>
    %182 = arith.mulf %171, %181 : vector<16x128xf32>
    %183 = arith.truncf %182 : vector<16x128xf32> to vector<16x128xbf16>
    %c0_111 = arith.constant 0 : index
    %c0_112 = arith.constant 0 : index
    %c0_113 = arith.constant 0 : index
    %184 = vector.load %arg16[%c0_111, %c0_112, %c0_113] : memref<1x128x32xbf16, #tpu.memory_space<vmem>>, vector<1x128x32xbf16>
    %185 = vector.shape_cast %184 : vector<1x128x32xbf16> to vector<128x32xbf16>
    %cst_114 = arith.constant dense<0.000000e+00> : vector<16x32xf32>
    %186 = tpu.matmul %183, %185, %cst_114 {dimension_numbers = #tpu.dot_dimension_numbers<[1], [0], [0], [1], [0, 0, 1, 1], [], []>} : vector<16x128xbf16>, vector<128x32xbf16>, vector<16x32xf32> -> vector<16x32xf32>
    %187 = arith.addf %137, %186 : vector<16x32xf32>
    %c0_115 = arith.constant 0 : index
    %c0_116 = arith.constant 0 : index
    %c0_117 = arith.constant 0 : index
    %188 = vector.load %arg17[%c0_115, %c0_116, %c0_117] : memref<1x1x32xf32, #tpu.memory_space<vmem>>, vector<1x1x32xf32>
    %189 = vector.shape_cast %188 : vector<1x1x32xf32> to vector<1x32xf32>
    %190 = vector.broadcast %189 : vector<1x32xf32> to vector<16x32xf32>
    %191 = arith.addf %187, %190 : vector<16x32xf32>
    %c0_118 = arith.constant 0 : index
    %c0_119 = arith.constant 0 : index
    %192 = vector.load %arg22[%c0_118, %c0_119] : memref<16x32xf32, #tpu.memory_space<vmem>>, vector<16x32xf32>
    tpu.vector_store %arg22[%c0_118, %c0_119], %191 {strides = array<i32>} : memref<16x32xf32, #tpu.memory_space<vmem>>, vector<16x32xf32>,
    %c1_i32 = arith.constant 1 : i32
    %193 = arith.cmpi eq, %arg0, %c1_i32 : i32
    %194 = arith.extui %193 : i1 to i32
    %c0_i32_120 = arith.constant 0 : i32
    %195 = arith.cmpi ne, %194, %c0_i32_120 : i32
    scf.if %195 {
      %c0_121 = arith.constant 0 : index
      %c0_122 = arith.constant 0 : index
      %196 = vector.load %arg18[%c0_121, %c0_122] : memref<1x32xf32, #tpu.memory_space<vmem>>, vector<1x32xf32>
      %c0_123 = arith.constant 0 : index
      %c0_124 = arith.constant 0 : index
      %197 = vector.load %arg19[%c0_123, %c0_124] : memref<1x32xf32, #tpu.memory_space<vmem>>, vector<1x32xf32>
      %cst_125 = arith.constant dense<0.000000e+00> : vector<16xf32>
      %198 = vector.multi_reduction <add>, %191, %cst_125 [1] : vector<16x32xf32> to vector<16xf32>
      %199 = vector.shape_cast %198 : vector<16xf32> to vector<16x1xf32>
      %cst_126 = arith.constant 3.200000e+01 : f32
      %200 = vector.broadcast %cst_126 : f32 to vector<16x1xf32>
      %201 = arith.divf %199, %200 : vector<16x1xf32>
      %202 = vector.broadcast %201 : vector<16x1xf32> to vector<16x32xf32>
      %203 = arith.subf %191, %202 : vector<16x32xf32>
      %204 = arith.mulf %203, %203 : vector<16x32xf32>
      %cst_127 = arith.constant dense<0.000000e+00> : vector<16xf32>
      %205 = vector.multi_reduction <add>, %204, %cst_127 [1] : vector<16x32xf32> to vector<16xf32>
      %206 = vector.shape_cast %205 : vector<16xf32> to vector<16x1xf32>
      %cst_128 = arith.constant 3.200000e+01 : f32
      %207 = vector.broadcast %cst_128 : f32 to vector<16x1xf32>
      %208 = arith.divf %206, %207 : vector<16x1xf32>
      %cst_129 = arith.constant 9.99999974E-6 : f32
      %209 = vector.broadcast %cst_129 : f32 to vector<16x1xf32>
      %210 = arith.addf %208, %209 : vector<16x1xf32>
      %211 = math.rsqrt %210 : vector<16x1xf32>
      %212 = vector.broadcast %211 : vector<16x1xf32> to vector<16x32xf32>
      %213 = arith.mulf %203, %212 : vector<16x32xf32>
      %214 = vector.broadcast %196 : vector<1x32xf32> to vector<16x32xf32>
      %215 = arith.mulf %213, %214 : vector<16x32xf32>
      %216 = vector.broadcast %197 : vector<1x32xf32> to vector<16x32xf32>
      %217 = arith.addf %215, %216 : vector<16x32xf32>
      %218 = arith.truncf %217 : vector<16x32xf32> to vector<16x32xbf16>
      %c0_130 = arith.constant 0 : index
      %c0_131 = arith.constant 0 : index
      %219 = vector.load %arg20[%c0_130, %c0_131] : memref<32x256xbf16, #tpu.memory_space<vmem>>, vector<32x256xbf16>
      %cst_132 = arith.constant dense<0.000000e+00> : vector<16x256xf32>
      %220 = tpu.matmul %218, %219, %cst_132 {dimension_numbers = #tpu.dot_dimension_numbers<[1], [0], [0], [1], [0, 0, 1, 1], [], []>} : vector<16x32xbf16>, vector<32x256xbf16>, vector<16x256xf32> -> vector<16x256xf32>
      %c0_133 = arith.constant 0 : index
      %c0_134 = arith.constant 0 : index
      %221 = vector.load %arg21[%c0_133, %c0_134] : memref<16x256xf32, #tpu.memory_space<vmem>>, vector<16x256xf32>
      tpu.vector_store %arg21[%c0_133, %c0_134], %220 {strides = array<i32>} : memref<16x256xf32, #tpu.memory_space<vmem>>, vector<16x256xf32>,
    } else {
    }
    return
  }
  func.func @transform_0(%arg0: i32) -> (i32, i32) {
    %c0_i32 = arith.constant 0 : i32
    %c0_i32_0 = arith.constant 0 : i32
    %c0_i32_1 = arith.constant 0 : i32
    return %c0_i32, %c0_i32_0 : i32, i32
  }
  func.func @transform_1(%arg0: i32) -> (i32, i32, i32) {
    %c0_i32 = arith.constant 0 : i32
    %c0_i32_0 = arith.constant 0 : i32
    %c0_i32_1 = arith.constant 0 : i32
    return %arg0, %c0_i32, %c0_i32_0 : i32, i32, i32
  }
  func.func @transform_2(%arg0: i32) -> (i32, i32, i32) {
    %c0_i32 = arith.constant 0 : i32
    %c0_i32_0 = arith.constant 0 : i32
    %c0_i32_1 = arith.constant 0 : i32
    return %arg0, %c0_i32, %c0_i32_0 : i32, i32, i32
  }
  func.func @transform_3(%arg0: i32) -> (i32, i32, i32, i32) {
    %c0_i32 = arith.constant 0 : i32
    %c0_i32_0 = arith.constant 0 : i32
    %c0_i32_1 = arith.constant 0 : i32
    %c0_i32_2 = arith.constant 0 : i32
    return %arg0, %c0_i32, %c0_i32_0, %c0_i32_1 : i32, i32, i32, i32
  }
  func.func @transform_4(%arg0: i32) -> (i32, i32, i32, i32) {
    %c0_i32 = arith.constant 0 : i32
    %c0_i32_0 = arith.constant 0 : i32
    %c0_i32_1 = arith.constant 0 : i32
    %c0_i32_2 = arith.constant 0 : i32
    return %arg0, %c0_i32, %c0_i32_0, %c0_i32_1 : i32, i32, i32, i32
  }
  func.func @transform_5(%arg0: i32) -> (i32, i32, i32, i32) {
    %c0_i32 = arith.constant 0 : i32
    %c0_i32_0 = arith.constant 0 : i32
    %c0_i32_1 = arith.constant 0 : i32
    %c0_i32_2 = arith.constant 0 : i32
    return %arg0, %c0_i32, %c0_i32_0, %c0_i32_1 : i32, i32, i32, i32
  }
  func.func @transform_6(%arg0: i32) -> (i32, i32, i32, i32) {
    %c0_i32 = arith.constant 0 : i32
    %c0_i32_0 = arith.constant 0 : i32
    %c0_i32_1 = arith.constant 0 : i32
    %c0_i32_2 = arith.constant 0 : i32
    return %arg0, %c0_i32, %c0_i32_0, %c0_i32_1 : i32, i32, i32, i32
  }
  func.func @transform_7(%arg0: i32) -> (i32, i32, i32, i32) {
    %c0_i32 = arith.constant 0 : i32
    %c0_i32_0 = arith.constant 0 : i32
    %c0_i32_1 = arith.constant 0 : i32
    %c0_i32_2 = arith.constant 0 : i32
    return %arg0, %c0_i32, %c0_i32_0, %c0_i32_1 : i32, i32, i32, i32
  }
  func.func @transform_8(%arg0: i32) -> (i32, i32, i32, i32) {
    %c0_i32 = arith.constant 0 : i32
    %c0_i32_0 = arith.constant 0 : i32
    %c0_i32_1 = arith.constant 0 : i32
    %c0_i32_2 = arith.constant 0 : i32
    return %arg0, %c0_i32, %c0_i32_0, %c0_i32_1 : i32, i32, i32, i32
  }
  func.func @transform_9(%arg0: i32) -> (i32, i32, i32, i32) {
    %c0_i32 = arith.constant 0 : i32
    %c0_i32_0 = arith.constant 0 : i32
    %c0_i32_1 = arith.constant 0 : i32
    %c0_i32_2 = arith.constant 0 : i32
    return %arg0, %c0_i32, %c0_i32_0, %c0_i32_1 : i32, i32, i32, i32
  }
  func.func @transform_10(%arg0: i32) -> (i32, i32, i32) {
    %c0_i32 = arith.constant 0 : i32
    %c0_i32_0 = arith.constant 0 : i32
    %c0_i32_1 = arith.constant 0 : i32
    return %arg0, %c0_i32, %c0_i32_0 : i32, i32, i32
  }
  func.func @transform_11(%arg0: i32) -> (i32, i32, i32) {
    %c0_i32 = arith.constant 0 : i32
    %c0_i32_0 = arith.constant 0 : i32
    %c0_i32_1 = arith.constant 0 : i32
    return %arg0, %c0_i32, %c0_i32_0 : i32, i32, i32
  }
  func.func @transform_12(%arg0: i32) -> (i32, i32, i32) {
    %c0_i32 = arith.constant 0 : i32
    %c0_i32_0 = arith.constant 0 : i32
    %c0_i32_1 = arith.constant 0 : i32
    return %arg0, %c0_i32, %c0_i32_0 : i32, i32, i32
  }
  func.func @transform_13(%arg0: i32) -> (i32, i32, i32) {
    %c0_i32 = arith.constant 0 : i32
    %c0_i32_0 = arith.constant 0 : i32
    %c0_i32_1 = arith.constant 0 : i32
    return %arg0, %c0_i32, %c0_i32_0 : i32, i32, i32
  }
  func.func @transform_14(%arg0: i32) -> (i32, i32, i32) {
    %c0_i32 = arith.constant 0 : i32
    %c0_i32_0 = arith.constant 0 : i32
    %c0_i32_1 = arith.constant 0 : i32
    return %arg0, %c0_i32, %c0_i32_0 : i32, i32, i32
  }
  func.func @transform_15(%arg0: i32) -> (i32, i32, i32) {
    %c0_i32 = arith.constant 0 : i32
    %c0_i32_0 = arith.constant 0 : i32
    %c0_i32_1 = arith.constant 0 : i32
    return %arg0, %c0_i32, %c0_i32_0 : i32, i32, i32
  }
  func.func @transform_16(%arg0: i32) -> (i32, i32, i32) {
    %c0_i32 = arith.constant 0 : i32
    %c0_i32_0 = arith.constant 0 : i32
    %c0_i32_1 = arith.constant 0 : i32
    return %arg0, %c0_i32, %c0_i32_0 : i32, i32, i32
  }
  func.func @transform_17(%arg0: i32) -> (i32, i32) {
    %c0_i32 = arith.constant 0 : i32
    %c0_i32_0 = arith.constant 0 : i32
    %c0_i32_1 = arith.constant 0 : i32
    return %c0_i32, %c0_i32_0 : i32, i32
  }
  func.func @transform_18(%arg0: i32) -> (i32, i32) {
    %c0_i32 = arith.constant 0 : i32
    %c0_i32_0 = arith.constant 0 : i32
    %c0_i32_1 = arith.constant 0 : i32
    return %c0_i32, %c0_i32_0 : i32, i32
  }
  func.func @transform_19(%arg0: i32) -> (i32, i32) {
    %c0_i32 = arith.constant 0 : i32
    %c0_i32_0 = arith.constant 0 : i32
    %c0_i32_1 = arith.constant 0 : i32
    return %c0_i32, %c0_i32_0 : i32, i32
  }
  func.func @transform_20(%arg0: i32) -> (i32, i32) {
    %c0_i32 = arith.constant 0 : i32
    %c0_i32_0 = arith.constant 0 : i32
    %c0_i32_1 = arith.constant 0 : i32
    return %c0_i32, %c0_i32_0 : i32, i32
  }
}

</mosaic_0001>

<llo_original>
// kernel: gpt_forward.1
$region0: #{gpt_forward.1}
  #allocation0 [shape = 'u32[]', space=smem, size = 0x4, offset = 0x4, fixed_abs, tag = 'smem constant byte address 0x4 - core index']
  #allocation1 [shape = 'u32[144,128]{1,0:T(1,128)}', space=vmem, size = 0x12000, scoped, tag = 'internal scratch']
  #allocation2 [shape = 'f32[16,32]{1,0:T(8,128)}', space=vmem, size = 0x2000, scoped, tag = 'scratch operand']
  %s0 = inlined_call_operand.vmem [shape: f32[16,32], index: 0, kind: input, shape index: {}]
  %s1 = inlined_call_operand.vmem [shape: f32[2,1,32], index: 1, kind: input, shape index: {}]
  %s2 = inlined_call_operand.vmem [shape: f32[2,1,32], index: 2, kind: input, shape index: {}]
  %s3 = inlined_call_operand.vmem [shape: bf16[2,2,32,16], index: 3, kind: input, shape index: {}]
  %s4 = inlined_call_operand.vmem [shape: f32[2,2,1,16], index: 4, kind: input, shape index: {}]
  %s5 = inlined_call_operand.vmem [shape: bf16[2,2,32,16], index: 5, kind: input, shape index: {}]
  %s6 = inlined_call_operand.vmem [shape: f32[2,2,1,16], index: 6, kind: input, shape index: {}]
  %s7 = inlined_call_operand.vmem [shape: bf16[2,2,32,16], index: 7, kind: input, shape index: {}]
  %s8 = inlined_call_operand.vmem [shape: f32[2,2,1,16], index: 8, kind: input, shape index: {}]
  %s9 = inlined_call_operand.vmem [shape: bf16[2,2,16,32], index: 9, kind: input, shape index: {}]
  %s10 = inlined_call_operand.vmem [shape: f32[2,1,32], index: 10, kind: input, shape index: {}]
  %s11 = inlined_call_operand.vmem [shape: f32[2,1,32], index: 11, kind: input, shape index: {}]
  %s12 = inlined_call_operand.vmem [shape: f32[2,1,32], index: 12, kind: input, shape index: {}]
  %s13 = inlined_call_operand.vmem [shape: bf16[2,32,128], index: 13, kind: input, shape index: {}]
  %s14 = inlined_call_operand.vmem [shape: f32[2,1,128], index: 14, kind: input, shape index: {}]
  %s15 = inlined_call_operand.vmem [shape: bf16[2,128,32], index: 15, kind: input, shape index: {}]
  %s16 = inlined_call_operand.vmem [shape: f32[2,1,32], index: 16, kind: input, shape index: {}]
  %s17 = inlined_call_operand.vmem [shape: f32[1,32], index: 17, kind: input, shape index: {}]
  %s18 = inlined_call_operand.vmem [shape: f32[1,32], index: 18, kind: input, shape index: {}]
  %s19 = inlined_call_operand.vmem [shape: bf16[32,256], index: 19, kind: input, shape index: {}]
  %s20 = inlined_call_operand.hbm [shape: f32[16,256], index: 20, kind: output, shape index: {}]
  %s21 = sld [smem:[#allocation0]]
  $region121: #{gpt_forward.1} parent=0
    _
  %s23 = ssub.s32 1, %s21
  %s24 = scalar_select 0, %s23, %s21
  $region1: #{gpt_forward.1} parent=0
    #allocation3 [shape = 'u8[16384]{0}', space=vmem, size = 0x4000, scoped, tag = 'output window, operand 0, single buffered']
    #allocation4 [shape = 's32[2]{0}', space=sflag, size = 0x8, scoped, tag = 'scoped memory for gpt_forward.1']
    %25 = vsyncpa [#allocation4], 0
    loop: start=0, step=1, limit=4
    $region2: #{gpt_forward.1} parent=1 // loop_pre_header
      _
    $region3: #{gpt_forward.1} parent=1 // loop_header
      %s27 = sphi 0, %s31
      %p28 = scmp.ge.s32.totalorder %s27, 4
      %s35 = sphi 0, %s35
      %s37 = sphi 0, %s35
      %s38 = sphi 0, %s37
      %s52 = sphi 0, %s38
      %s58 = sphi 0, %s60
      %s61 = sphi 0, %s58
      %s62 = sphi 0, %s61
      %s78 = sphi 0, %s62
      %s84 = sphi 0, %s86
      %s87 = sphi 0, %s84
      %s88 = sphi 0, %s87
      %s104 = sphi 0, %s88
      %s110 = sphi 0, %s112
      %s113 = sphi 0, %s110
      %s114 = sphi 0, %s113
      %s130 = sphi 0, %s114
      %s136 = sphi 0, %s138
      %s139 = sphi 0, %s136
      %s140 = sphi 0, %s139
      %s156 = sphi 0, %s140
      %s162 = sphi 0, %s164
      %s165 = sphi 0, %s162
      %s166 = sphi 0, %s165
      %s182 = sphi 0, %s166
      %s188 = sphi 0, %s190
      %s191 = sphi 0, %s188
      %s192 = sphi 0, %s191
      %s208 = sphi 0, %s192
      %s214 = sphi 0, %s216
      %s217 = sphi 0, %s214
      %s218 = sphi 0, %s217
      %s234 = sphi 0, %s218
      %s240 = sphi 0, %s242
      %s243 = sphi 0, %s240
      %s244 = sphi 0, %s243
      %s260 = sphi 0, %s244
      %s266 = sphi 0, %s268
      %s269 = sphi 0, %s266
      %s270 = sphi 0, %s269
      %s286 = sphi 0, %s270
      %s292 = sphi 0, %s294
      %s295 = sphi 0, %s292
      %s296 = sphi 0, %s295
      %s312 = sphi 0, %s296
      %s318 = sphi 0, %s320
      %s321 = sphi 0, %s318
      %s322 = sphi 0, %s321
      %s338 = sphi 0, %s322
      %s344 = sphi 0, %s346
      %s347 = sphi 0, %s344
      %s348 = sphi 0, %s347
      %s364 = sphi 0, %s348
      %s370 = sphi 0, %s372
      %s373 = sphi 0, %s370
      %s374 = sphi 0, %s373
      %s390 = sphi 0, %s374
      %s396 = sphi 0, %s398
      %s399 = sphi 0, %s396
      %s400 = sphi 0, %s399
      %s416 = sphi 0, %s400
      %s422 = sphi 0, %s424
      %s425 = sphi 0, %s422
      %s426 = sphi 0, %s425
      %s442 = sphi 0, %s426
      %s448 = sphi 0, %s450
      %s451 = sphi 0, %s448
      %s452 = sphi 0, %s451
      %s468 = sphi 0, %s452
      %s472 = sphi 0, %s472
      %s474 = sphi 0, %s472
      %s475 = sphi 0, %s474
      %s489 = sphi 0, %s475
      %s493 = sphi 0, %s493
      %s495 = sphi 0, %s493
      %s496 = sphi 0, %s495
      %s510 = sphi 0, %s496
      %s514 = sphi 0, %s514
      %s516 = sphi 0, %s514
      %s517 = sphi 0, %s516
      %s531 = sphi 0, %s517
      %s535 = sphi 0, %s535
      %s537 = sphi 0, %s535
      %s538 = sphi 0, %s537
      %s552 = sphi 0, %s538
    $region4: #{gpt_forward.1} parent=1 // loop_header_branch
      %30 = sbr.rel (%p28) target = $region8
    $region5: #{gpt_forward.1} parent=1 // loop_body
      %s32 = ssub.s32 %s27, 1
      %s33 = ssub.s32 %s27, 2
      %s34 = sadd.s32 %s27, 1
      %s36 = sadd.s32 %s35, 1
      %p39 = scmp.eq.s32.totalorder %s27, 1
      %p40 = scmp.ne.s32.totalorder %s35, %s37
      %p41 = scmp.eq.s32.totalorder %s27, 0
      %p42 = por %p40, %p41
      %p43 = scmp.ne.s32.totalorder %s35, %s37
      %p44 = scmp.eq.s32.totalorder %s32, 1
      %p45 = por %p43, %p44
      %p46 = scmp.ne.s32.totalorder %s37, %s38
      %p47 = scmp.eq.s32.totalorder %s32, 0
      %p48 = por %p46, %p47
      %p49 = scmp.ne.s32.totalorder %s37, %s38
      %p50 = scmp.eq.s32.totalorder %s33, 1
      %p51 = por %p49, %p50
      %p53 = scmp.ne.s32.totalorder %s38, %s52
      %p54 = scmp.eq.s32.totalorder %s33, 0
      %p55 = por %p53, %p54
      %s56 = ssub.s32 %s27, %s34
      %p57 = scmp.eq.s32.totalorder %s56, 0
      %s59 = sadd.s32 %s58, 1
      %s60 = scalar_select %p57, %s58, %s59
      %p63 = pneg %p57
      %p64 = scmp.eq.s32.totalorder %s27, 1
      %p65 = por %p63, %p64
      %p66 = scmp.ne.s32.totalorder %s58, %s61
      %p67 = scmp.eq.s32.totalorder %s27, 0
      %p68 = por %p66, %p67
      %p69 = scmp.ne.s32.totalorder %s58, %s61
      %p70 = scmp.eq.s32.totalorder %s32, 1
      %p71 = por %p69, %p70
      %p72 = scmp.ne.s32.totalorder %s61, %s62
      %p73 = scmp.eq.s32.totalorder %s32, 0
      %p74 = por %p72, %p73
      %p75 = scmp.ne.s32.totalorder %s61, %s62
      %p76 = scmp.eq.s32.totalorder %s33, 1
      %p77 = por %p75, %p76
      %p79 = scmp.ne.s32.totalorder %s62, %s78
      %p80 = scmp.eq.s32.totalorder %s33, 0
      %p81 = por %p79, %p80
      %s82 = ssub.s32 %s27, %s34
      %p83 = scmp.eq.s32.totalorder %s82, 0
      %s85 = sadd.s32 %s84, 1
      %s86 = scalar_select %p83, %s84, %s85
      %p89 = pneg %p83
      %p90 = scmp.eq.s32.totalorder %s27, 1
      %p91 = por %p89, %p90
      %p92 = scmp.ne.s32.totalorder %s84, %s87
      %p93 = scmp.eq.s32.totalorder %s27, 0
      %p94 = por %p92, %p93
      %p95 = scmp.ne.s32.totalorder %s84, %s87
      %p96 = scmp.eq.s32.totalorder %s32, 1
      %p97 = por %p95, %p96
      %p98 = scmp.ne.s32.totalorder %s87, %s88
      %p99 = scmp.eq.s32.totalorder %s32, 0
      %p100 = por %p98, %p99
      %p101 = scmp.ne.s32.totalorder %s87, %s88
      %p102 = scmp.eq.s32.totalorder %s33, 1
      %p103 = por %p101, %p102
      %p105 = scmp.ne.s32.totalorder %s88, %s104
      %p106 = scmp.eq.s32.totalorder %s33, 0
      %p107 = por %p105, %p106
      %s108 = ssub.s32 %s27, %s34
      %p109 = scmp.eq.s32.totalorder %s108, 0
      %s111 = sadd.s32 %s110, 1
      %s112 = scalar_select %p109, %s110, %s111
      %p115 = pneg %p109
      %p116 = scmp.eq.s32.totalorder %s27, 1
      %p117 = por %p115, %p116
      %p118 = scmp.ne.s32.totalorder %s110, %s113
      %p119 = scmp.eq.s32.totalorder %s27, 0
      %p120 = por %p118, %p119
      %p121 = scmp.ne.s32.totalorder %s110, %s113
      %p122 = scmp.eq.s32.totalorder %s32, 1
      %p123 = por %p121, %p122
      %p124 = scmp.ne.s32.totalorder %s113, %s114
      %p125 = scmp.eq.s32.totalorder %s32, 0
      %p126 = por %p124, %p125
      %p127 = scmp.ne.s32.totalorder %s113, %s114
      %p128 = scmp.eq.s32.totalorder %s33, 1
      %p129 = por %p127, %p128
      %p131 = scmp.ne.s32.totalorder %s114, %s130
      %p132 = scmp.eq.s32.totalorder %s33, 0
      %p133 = por %p131, %p132
      %s134 = ssub.s32 %s27, %s34
      %p135 = scmp.eq.s32.totalorder %s134, 0
      %s137 = sadd.s32 %s136, 1
      %s138 = scalar_select %p135, %s136, %s137
      %p141 = pneg %p135
      %p142 = scmp.eq.s32.totalorder %s27, 1
      %p143 = por %p141, %p142
      %p144 = scmp.ne.s32.totalorder %s136, %s139
      %p145 = scmp.eq.s32.totalorder %s27, 0
      %p146 = por %p144, %p145
      %p147 = scmp.ne.s32.totalorder %s136, %s139
      %p148 = scmp.eq.s32.totalorder %s32, 1
      %p149 = por %p147, %p148
      %p150 = scmp.ne.s32.totalorder %s139, %s140
      %p151 = scmp.eq.s32.totalorder %s32, 0
      %p152 = por %p150, %p151
      %p153 = scmp.ne.s32.totalorder %s139, %s140
      %p154 = scmp.eq.s32.totalorder %s33, 1
      %p155 = por %p153, %p154
      %p157 = scmp.ne.s32.totalorder %s140, %s156
      %p158 = scmp.eq.s32.totalorder %s33, 0
      %p159 = por %p157, %p158
      %s160 = ssub.s32 %s27, %s34
      %p161 = scmp.eq.s32.totalorder %s160, 0
      %s163 = sadd.s32 %s162, 1
      %s164 = scalar_select %p161, %s162, %s163
      %p167 = pneg %p161
      %p168 = scmp.eq.s32.totalorder %s27, 1
      %p169 = por %p167, %p168
      %p170 = scmp.ne.s32.totalorder %s162, %s165
      %p171 = scmp.eq.s32.totalorder %s27, 0
      %p172 = por %p170, %p171
      %p173 = scmp.ne.s32.totalorder %s162, %s165
      %p174 = scmp.eq.s32.totalorder %s32, 1
      %p175 = por %p173, %p174
      %p176 = scmp.ne.s32.totalorder %s165, %s166
      %p177 = scmp.eq.s32.totalorder %s32, 0
      %p178 = por %p176, %p177
      %p179 = scmp.ne.s32.totalorder %s165, %s166
      %p180 = scmp.eq.s32.totalorder %s33, 1
      %p181 = por %p179, %p180
      %p183 = scmp.ne.s32.totalorder %s166, %s182
      %p184 = scmp.eq.s32.totalorder %s33, 0
      %p185 = por %p183, %p184
      %s186 = ssub.s32 %s27, %s34
      %p187 = scmp.eq.s32.totalorder %s186, 0
      %s189 = sadd.s32 %s188, 1
      %s190 = scalar_select %p187, %s188, %s189
      %p193 = pneg %p187
      %p194 = scmp.eq.s32.totalorder %s27, 1
      %p195 = por %p193, %p194
      %p196 = scmp.ne.s32.totalorder %s188, %s191
      %p197 = scmp.eq.s32.totalorder %s27, 0
      %p198 = por %p196, %p197
      %p199 = scmp.ne.s32.totalorder %s188, %s191
      %p200 = scmp.eq.s32.totalorder %s32, 1
      %p201 = por %p199, %p200
      %p202 = scmp.ne.s32.totalorder %s191, %s192
      %p203 = scmp.eq.s32.totalorder %s32, 0
      %p204 = por %p202, %p203
      %p205 = scmp.ne.s32.totalorder %s191, %s192
      %p206 = scmp.eq.s32.totalorder %s33, 1
      %p207 = por %p205, %p206
      %p209 = scmp.ne.s32.totalorder %s192, %s208
      %p210 = scmp.eq.s32.totalorder %s33, 0
      %p211 = por %p209, %p210
      %s212 = ssub.s32 %s27, %s34
      %p213 = scmp.eq.s32.totalorder %s212, 0
      %s215 = sadd.s32 %s214, 1
      %s216 = scalar_select %p213, %s214, %s215
      %p219 = pneg %p213
      %p220 = scmp.eq.s32.totalorder %s27, 1
      %p221 = por %p219, %p220
      %p222 = scmp.ne.s32.totalorder %s214, %s217
      %p223 = scmp.eq.s32.totalorder %s27, 0
      %p224 = por %p222, %p223
      %p225 = scmp.ne.s32.totalorder %s214, %s217
      %p226 = scmp.eq.s32.totalorder %s32, 1
      %p227 = por %p225, %p226
      %p228 = scmp.ne.s32.totalorder %s217, %s218
      %p229 = scmp.eq.s32.totalorder %s32, 0
      %p230 = por %p228, %p229
      %p231 = scmp.ne.s32.totalorder %s217, %s218
      %p232 = scmp.eq.s32.totalorder %s33, 1
      %p233 = por %p231, %p232
      %p235 = scmp.ne.s32.totalorder %s218, %s234
      %p236 = scmp.eq.s32.totalorder %s33, 0
      %p237 = por %p235, %p236
      %s238 = ssub.s32 %s27, %s34
      %p239 = scmp.eq.s32.totalorder %s238, 0
      %s241 = sadd.s32 %s240, 1
      %s242 = scalar_select %p239, %s240, %s241
      %p245 = pneg %p239
      %p246 = scmp.eq.s32.totalorder %s27, 1
      %p247 = por %p245, %p246
      %p248 = scmp.ne.s32.totalorder %s240, %s243
      %p249 = scmp.eq.s32.totalorder %s27, 0
      %p250 = por %p248, %p249
      %p251 = scmp.ne.s32.totalorder %s240, %s243
      %p252 = scmp.eq.s32.totalorder %s32, 1
      %p253 = por %p251, %p252
      %p254 = scmp.ne.s32.totalorder %s243, %s244
      %p255 = scmp.eq.s32.totalorder %s32, 0
      %p256 = por %p254, %p255
      %p257 = scmp.ne.s32.totalorder %s243, %s244
      %p258 = scmp.eq.s32.totalorder %s33, 1
      %p259 = por %p257, %p258
      %p261 = scmp.ne.s32.totalorder %s244, %s260
      %p262 = scmp.eq.s32.totalorder %s33, 0
      %p263 = por %p261, %p262
      %s264 = ssub.s32 %s27, %s34
      %p265 = scmp.eq.s32.totalorder %s264, 0
      %s267 = sadd.s32 %s266, 1
      %s268 = scalar_select %p265, %s266, %s267
      %p271 = pneg %p265
      %p272 = scmp.eq.s32.totalorder %s27, 1
      %p273 = por %p271, %p272
      %p274 = scmp.ne.s32.totalorder %s266, %s269
      %p275 = scmp.eq.s32.totalorder %s27, 0
      %p276 = por %p274, %p275
      %p277 = scmp.ne.s32.totalorder %s266, %s269
      %p278 = scmp.eq.s32.totalorder %s32, 1
      %p279 = por %p277, %p278
      %p280 = scmp.ne.s32.totalorder %s269, %s270
      %p281 = scmp.eq.s32.totalorder %s32, 0
      %p282 = por %p280, %p281
      %p283 = scmp.ne.s32.totalorder %s269, %s270
      %p284 = scmp.eq.s32.totalorder %s33, 1
      %p285 = por %p283, %p284
      %p287 = scmp.ne.s32.totalorder %s270, %s286
      %p288 = scmp.eq.s32.totalorder %s33, 0
      %p289 = por %p287, %p288
      %s290 = ssub.s32 %s27, %s34
      %p291 = scmp.eq.s32.totalorder %s290, 0
      %s293 = sadd.s32 %s292, 1
      %s294 = scalar_select %p291, %s292, %s293
      %p297 = pneg %p291
      %p298 = scmp.eq.s32.totalorder %s27, 1
      %p299 = por %p297, %p298
      %p300 = scmp.ne.s32.totalorder %s292, %s295
      %p301 = scmp.eq.s32.totalorder %s27, 0
      %p302 = por %p300, %p301
      %p303 = scmp.ne.s32.totalorder %s292, %s295
      %p304 = scmp.eq.s32.totalorder %s32, 1
      %p305 = por %p303, %p304
      %p306 = scmp.ne.s32.totalorder %s295, %s296
      %p307 = scmp.eq.s32.totalorder %s32, 0
      %p308 = por %p306, %p307
      %p309 = scmp.ne.s32.totalorder %s295, %s296
      %p310 = scmp.eq.s32.totalorder %s33, 1
      %p311 = por %p309, %p310
      %p313 = scmp.ne.s32.totalorder %s296, %s312
      %p314 = scmp.eq.s32.totalorder %s33, 0
      %p315 = por %p313, %p314
      %s316 = ssub.s32 %s27, %s34
      %p317 = scmp.eq.s32.totalorder %s316, 0
      %s319 = sadd.s32 %s318, 1
      %s320 = scalar_select %p317, %s318, %s319
      %p323 = pneg %p317
      %p324 = scmp.eq.s32.totalorder %s27, 1
      %p325 = por %p323, %p324
      %p326 = scmp.ne.s32.totalorder %s318, %s321
      %p327 = scmp.eq.s32.totalorder %s27, 0
      %p328 = por %p326, %p327
      %p329 = scmp.ne.s32.totalorder %s318, %s321
      %p330 = scmp.eq.s32.totalorder %s32, 1
      %p331 = por %p329, %p330
      %p332 = scmp.ne.s32.totalorder %s321, %s322
      %p333 = scmp.eq.s32.totalorder %s32, 0
      %p334 = por %p332, %p333
      %p335 = scmp.ne.s32.totalorder %s321, %s322
      %p336 = scmp.eq.s32.totalorder %s33, 1
      %p337 = por %p335, %p336
      %p339 = scmp.ne.s32.totalorder %s322, %s338
      %p340 = scmp.eq.s32.totalorder %s33, 0
      %p341 = por %p339, %p340
      %s342 = ssub.s32 %s27, %s34
      %p343 = scmp.eq.s32.totalorder %s342, 0
      %s345 = sadd.s32 %s344, 1
      %s346 = scalar_select %p343, %s344, %s345
      %p349 = pneg %p343
      %p350 = scmp.eq.s32.totalorder %s27, 1
      %p351 = por %p349, %p350
      %p352 = scmp.ne.s32.totalorder %s344, %s347
      %p353 = scmp.eq.s32.totalorder %s27, 0
      %p354 = por %p352, %p353
      %p355 = scmp.ne.s32.totalorder %s344, %s347
      %p356 = scmp.eq.s32.totalorder %s32, 1
      %p357 = por %p355, %p356
      %p358 = scmp.ne.s32.totalorder %s347, %s348
      %p359 = scmp.eq.s32.totalorder %s32, 0
      %p360 = por %p358, %p359
      %p361 = scmp.ne.s32.totalorder %s347, %s348
      %p362 = scmp.eq.s32.totalorder %s33, 1
      %p363 = por %p361, %p362
      %p365 = scmp.ne.s32.totalorder %s348, %s364
      %p366 = scmp.eq.s32.totalorder %s33, 0
      %p367 = por %p365, %p366
      %s368 = ssub.s32 %s27, %s34
      %p369 = scmp.eq.s32.totalorder %s368, 0
      %s371 = sadd.s32 %s370, 1
      %s372 = scalar_select %p369, %s370, %s371
      %p375 = pneg %p369
      %p376 = scmp.eq.s32.totalorder %s27, 1
      %p377 = por %p375, %p376
      %p378 = scmp.ne.s32.totalorder %s370, %s373
      %p379 = scmp.eq.s32.totalorder %s27, 0
      %p380 = por %p378, %p379
      %p381 = scmp.ne.s32.totalorder %s370, %s373
      %p382 = scmp.eq.s32.totalorder %s32, 1
      %p383 = por %p381, %p382
      %p384 = scmp.ne.s32.totalorder %s373, %s374
      %p385 = scmp.eq.s32.totalorder %s32, 0
      %p386 = por %p384, %p385
      %p387 = scmp.ne.s32.totalorder %s373, %s374
      %p388 = scmp.eq.s32.totalorder %s33, 1
      %p389 = por %p387, %p388
      %p391 = scmp.ne.s32.totalorder %s374, %s390
      %p392 = scmp.eq.s32.totalorder %s33, 0
      %p393 = por %p391, %p392
      %s394 = ssub.s32 %s27, %s34
      %p395 = scmp.eq.s32.totalorder %s394, 0
      %s397 = sadd.s32 %s396, 1
      %s398 = scalar_select %p395, %s396, %s397
      %p401 = pneg %p395
      %p402 = scmp.eq.s32.totalorder %s27, 1
      %p403 = por %p401, %p402
      %p404 = scmp.ne.s32.totalorder %s396, %s399
      %p405 = scmp.eq.s32.totalorder %s27, 0
      %p406 = por %p404, %p405
      %p407 = scmp.ne.s32.totalorder %s396, %s399
      %p408 = scmp.eq.s32.totalorder %s32, 1
      %p409 = por %p407, %p408
      %p410 = scmp.ne.s32.totalorder %s399, %s400
      %p411 = scmp.eq.s32.totalorder %s32, 0
      %p412 = por %p410, %p411
      %p413 = scmp.ne.s32.totalorder %s399, %s400
      %p414 = scmp.eq.s32.totalorder %s33, 1
      %p415 = por %p413, %p414
      %p417 = scmp.ne.s32.totalorder %s400, %s416
      %p418 = scmp.eq.s32.totalorder %s33, 0
      %p419 = por %p417, %p418
      %s420 = ssub.s32 %s27, %s34
      %p421 = scmp.eq.s32.totalorder %s420, 0
      %s423 = sadd.s32 %s422, 1
      %s424 = scalar_select %p421, %s422, %s423
      %p427 = pneg %p421
      %p428 = scmp.eq.s32.totalorder %s27, 1
      %p429 = por %p427, %p428
      %p430 = scmp.ne.s32.totalorder %s422, %s425
      %p431 = scmp.eq.s32.totalorder %s27, 0
      %p432 = por %p430, %p431
      %p433 = scmp.ne.s32.totalorder %s422, %s425
      %p434 = scmp.eq.s32.totalorder %s32, 1
      %p435 = por %p433, %p434
      %p436 = scmp.ne.s32.totalorder %s425, %s426
      %p437 = scmp.eq.s32.totalorder %s32, 0
      %p438 = por %p436, %p437
      %p439 = scmp.ne.s32.totalorder %s425, %s426
      %p440 = scmp.eq.s32.totalorder %s33, 1
      %p441 = por %p439, %p440
      %p443 = scmp.ne.s32.totalorder %s426, %s442
      %p444 = scmp.eq.s32.totalorder %s33, 0
      %p445 = por %p443, %p444
      %s446 = ssub.s32 %s27, %s34
      %p447 = scmp.eq.s32.totalorder %s446, 0
      %s449 = sadd.s32 %s448, 1
      %s450 = scalar_select %p447, %s448, %s449
      %p453 = pneg %p447
      %p454 = scmp.eq.s32.totalorder %s27, 1
      %p455 = por %p453, %p454
      %p456 = scmp.ne.s32.totalorder %s448, %s451
      %p457 = scmp.eq.s32.totalorder %s27, 0
      %p458 = por %p456, %p457
      %p459 = scmp.ne.s32.totalorder %s448, %s451
      %p460 = scmp.eq.s32.totalorder %s32, 1
      %p461 = por %p459, %p460
      %p462 = scmp.ne.s32.totalorder %s451, %s452
      %p463 = scmp.eq.s32.totalorder %s32, 0
      %p464 = por %p462, %p463
      %p465 = scmp.ne.s32.totalorder %s451, %s452
      %p466 = scmp.eq.s32.totalorder %s33, 1
      %p467 = por %p465, %p466
      %p469 = scmp.ne.s32.totalorder %s452, %s468
      %p470 = scmp.eq.s32.totalorder %s33, 0
      %p471 = por %p469, %p470
      %s473 = sadd.s32 %s472, 1
      %p476 = scmp.eq.s32.totalorder %s27, 1
      %p477 = scmp.ne.s32.totalorder %s472, %s474
      %p478 = scmp.eq.s32.totalorder %s27, 0
      %p479 = por %p477, %p478
      %p480 = scmp.ne.s32.totalorder %s472, %s474
      %p481 = scmp.eq.s32.totalorder %s32, 1
      %p482 = por %p480, %p481
      %p483 = scmp.ne.s32.totalorder %s474, %s475
      %p484 = scmp.eq.s32.totalorder %s32, 0
      %p485 = por %p483, %p484
      %p486 = scmp.ne.s32.totalorder %s474, %s475
      %p487 = scmp.eq.s32.totalorder %s33, 1
      %p488 = por %p486, %p487
      %p490 = scmp.ne.s32.totalorder %s475, %s489
      %p491 = scmp.eq.s32.totalorder %s33, 0
      %p492 = por %p490, %p491
      %s494 = sadd.s32 %s493, 1
      %p497 = scmp.eq.s32.totalorder %s27, 1
      %p498 = scmp.ne.s32.totalorder %s493, %s495
      %p499 = scmp.eq.s32.totalorder %s27, 0
      %p500 = por %p498, %p499
      %p501 = scmp.ne.s32.totalorder %s493, %s495
      %p502 = scmp.eq.s32.totalorder %s32, 1
      %p503 = por %p501, %p502
      %p504 = scmp.ne.s32.totalorder %s495, %s496
      %p505 = scmp.eq.s32.totalorder %s32, 0
      %p506 = por %p504, %p505
      %p507 = scmp.ne.s32.totalorder %s495, %s496
      %p508 = scmp.eq.s32.totalorder %s33, 1
      %p509 = por %p507, %p508
      %p511 = scmp.ne.s32.totalorder %s496, %s510
      %p512 = scmp.eq.s32.totalorder %s33, 0
      %p513 = por %p511, %p512
      %s515 = sadd.s32 %s514, 1
      %p518 = scmp.eq.s32.totalorder %s27, 1
      %p519 = scmp.ne.s32.totalorder %s514, %s516
      %p520 = scmp.eq.s32.totalorder %s27, 0
      %p521 = por %p519, %p520
      %p522 = scmp.ne.s32.totalorder %s514, %s516
      %p523 = scmp.eq.s32.totalorder %s32, 1
      %p524 = por %p522, %p523
      %p525 = scmp.ne.s32.totalorder %s516, %s517
      %p526 = scmp.eq.s32.totalorder %s32, 0
      %p527 = por %p525, %p526
      %p528 = scmp.ne.s32.totalorder %s516, %s517
      %p529 = scmp.eq.s32.totalorder %s33, 1
      %p530 = por %p528, %p529
      %p532 = scmp.ne.s32.totalorder %s517, %s531
      %p533 = scmp.eq.s32.totalorder %s33, 0
      %p534 = por %p532, %p533
      %s536 = sadd.s32 %s535, 1
      %p539 = scmp.eq.s32.totalorder %s27, 1
      %p540 = scmp.ne.s32.totalorder %s535, %s537
      %p541 = scmp.eq.s32.totalorder %s27, 0
      %p542 = por %p540, %p541
      %p543 = scmp.ne.s32.totalorder %s535, %s537
      %p544 = scmp.eq.s32.totalorder %s32, 1
      %p545 = por %p543, %p544
      %p546 = scmp.ne.s32.totalorder %s537, %s538
      %p547 = scmp.eq.s32.totalorder %s32, 0
      %p548 = por %p546, %p547
      %p549 = scmp.ne.s32.totalorder %s537, %s538
      %p550 = scmp.eq.s32.totalorder %s33, 1
      %p551 = por %p549, %p550
      %p553 = scmp.ne.s32.totalorder %s538, %s552
      %p554 = scmp.eq.s32.totalorder %s33, 0
      %p555 = por %p553, %p554
      %p556 = scmp.le.s32.totalorder 1, %s27
      %p557 = scmp.lt.s32.totalorder %s27, 3
      %p558 = pnand %p556, %p557
      %p559 = pneg %p558
      // Predicated region
      $region9: #{gpt_forward.1} parent=5 // pred_check
        _
      $region10: #{gpt_forward.1} parent=5 // pred_check_branch
        %561 = sbr.rel (%p558) target = $region12
      $region11: #{gpt_forward.1} parent=5 // pred_region
        %s562 = ssub.s32 %s27, 1
        // Predicated region
        $region13: #{gpt_forward.1} parent=11 // pred_check
          %p563 = pneg %p48
        $region14: #{gpt_forward.1} parent=11 // pred_check_branch
          %565 = sbr.rel (%p563) target = $region16
        $region15: #{gpt_forward.1} parent=11 // pred_region
          _
        $region16: #{gpt_forward.1} parent=11 // pred_fallthru
          _
        // Predicated region
        $region17: #{gpt_forward.1} parent=11 // pred_check
          %p566 = pneg %p485
        $region18: #{gpt_forward.1} parent=11 // pred_check_branch
          %568 = sbr.rel (%p566) target = $region20
        $region19: #{gpt_forward.1} parent=11 // pred_region
          _
        $region20: #{gpt_forward.1} parent=11 // pred_fallthru
          _
        // Predicated region
        $region21: #{gpt_forward.1} parent=11 // pred_check
          %p569 = pneg %p506
        $region22: #{gpt_forward.1} parent=11 // pred_check_branch
          %571 = sbr.rel (%p569) target = $region24
        $region23: #{gpt_forward.1} parent=11 // pred_region
          _
        $region24: #{gpt_forward.1} parent=11 // pred_fallthru
          _
        // Predicated region
        $region25: #{gpt_forward.1} parent=11 // pred_check
          %p572 = pneg %p527
        $region26: #{gpt_forward.1} parent=11 // pred_check_branch
          %574 = sbr.rel (%p572) target = $region28
        $region27: #{gpt_forward.1} parent=11 // pred_region
          _
        $region28: #{gpt_forward.1} parent=11 // pred_fallthru
          _
      $region12: #{gpt_forward.1} parent=5 // pred_fallthru
        _
      %p575 = scmp.lt.s32.totalorder %s27, 2
      // Predicated region
      $region29: #{gpt_forward.1} parent=5 // pred_check
        %p576 = pneg %p575
      $region30: #{gpt_forward.1} parent=5 // pred_check_branch
        %578 = sbr.rel (%p576) target = $region32
      $region31: #{gpt_forward.1} parent=5 // pred_region
        // Predicated region
        $region33: #{gpt_forward.1} parent=31 // pred_check
          %p579 = pneg %p68
        $region34: #{gpt_forward.1} parent=31 // pred_check_branch
          %581 = sbr.rel (%p579) target = $region36
        $region35: #{gpt_forward.1} parent=31 // pred_region
          %p582 = scmp.lt.s32.totalorder %s27, 1
          %s583 = scalar_select %p582, %s27, 1
          %s584 = scalar_lea.vmem %s1, %s583
        $region36: #{gpt_forward.1} parent=31 // pred_fallthru
          _
        // Predicated region
        $region37: #{gpt_forward.1} parent=31 // pred_check
          %p585 = pneg %p94
        $region38: #{gpt_forward.1} parent=31 // pred_check_branch
          %587 = sbr.rel (%p585) target = $region40
        $region39: #{gpt_forward.1} parent=31 // pred_region
          %p588 = scmp.lt.s32.totalorder %s27, 1
          %s589 = scalar_select %p588, %s27, 1
          %s590 = scalar_lea.vmem %s2, %s589
        $region40: #{gpt_forward.1} parent=31 // pred_fallthru
          _
        // Predicated region
        $region41: #{gpt_forward.1} parent=31 // pred_check
          %p591 = pneg %p120
        $region42: #{gpt_forward.1} parent=31 // pred_check_branch
          %593 = sbr.rel (%p591) target = $region44
        $region43: #{gpt_forward.1} parent=31 // pred_region
          %p594 = scmp.lt.s32.totalorder %s27, 1
          %s595 = scalar_select %p594, %s27, 1
          %s596 = smul.addr %s595, 8
          %s597 = smul.addr %s596, 4
          %s598 = scalar_lea.vmem %s3, %s597
        $region44: #{gpt_forward.1} parent=31 // pred_fallthru
          _
        // Predicated region
        $region45: #{gpt_forward.1} parent=31 // pred_check
          %p599 = pneg %p146
        $region46: #{gpt_forward.1} parent=31 // pred_check_branch
          %601 = sbr.rel (%p599) target = $region48
        $region47: #{gpt_forward.1} parent=31 // pred_region
          %p602 = scmp.lt.s32.totalorder %s27, 1
          %s603 = scalar_select %p602, %s27, 1
          %s604 = smul.addr %s603, 2
          %s605 = scalar_lea.vmem %s4, %s604
        $region48: #{gpt_forward.1} parent=31 // pred_fallthru
          _
        // Predicated region
        $region49: #{gpt_forward.1} parent=31 // pred_check
          %p606 = pneg %p172
        $region50: #{gpt_forward.1} parent=31 // pred_check_branch
          %608 = sbr.rel (%p606) target = $region52
        $region51: #{gpt_forward.1} parent=31 // pred_region
          %p609 = scmp.lt.s32.totalorder %s27, 1
          %s610 = scalar_select %p609, %s27, 1
          %s611 = smul.addr %s610, 8
          %s612 = smul.addr %s611, 4
          %s613 = scalar_lea.vmem %s5, %s612
        $region52: #{gpt_forward.1} parent=31 // pred_fallthru
          _
        // Predicated region
        $region53: #{gpt_forward.1} parent=31 // pred_check
          %p614 = pneg %p198
        $region54: #{gpt_forward.1} parent=31 // pred_check_branch
          %616 = sbr.rel (%p614) target = $region56
        $region55: #{gpt_forward.1} parent=31 // pred_region
          %p617 = scmp.lt.s32.totalorder %s27, 1
          %s618 = scalar_select %p617, %s27, 1
          %s619 = smul.addr %s618, 2
          %s620 = scalar_lea.vmem %s6, %s619
        $region56: #{gpt_forward.1} parent=31 // pred_fallthru
          _
        // Predicated region
        $region57: #{gpt_forward.1} parent=31 // pred_check
          %p621 = pneg %p224
        $region58: #{gpt_forward.1} parent=31 // pred_check_branch
          %623 = sbr.rel (%p621) target = $region60
        $region59: #{gpt_forward.1} parent=31 // pred_region
          %p624 = scmp.lt.s32.totalorder %s27, 1
          %s625 = scalar_select %p624, %s27, 1
          %s626 = smul.addr %s625, 8
          %s627 = smul.addr %s626, 4
          %s628 = scalar_lea.vmem %s7, %s627
        $region60: #{gpt_forward.1} parent=31 // pred_fallthru
          _
        // Predicated region
        $region61: #{gpt_forward.1} parent=31 // pred_check
          %p629 = pneg %p250
        $region62: #{gpt_forward.1} parent=31 // pred_check_branch
          %631 = sbr.rel (%p629) target = $region64
        $region63: #{gpt_forward.1} parent=31 // pred_region
          %p632 = scmp.lt.s32.totalorder %s27, 1
          %s633 = scalar_select %p632, %s27, 1
          %s634 = smul.addr %s633, 2
          %s635 = scalar_lea.vmem %s8, %s634
        $region64: #{gpt_forward.1} parent=31 // pred_fallthru
          _
        // Predicated region
        $region65: #{gpt_forward.1} parent=31 // pred_check
          %p636 = pneg %p276
        $region66: #{gpt_forward.1} parent=31 // pred_check_branch
          %638 = sbr.rel (%p636) target = $region68
        $region67: #{gpt_forward.1} parent=31 // pred_region
          %p639 = scmp.lt.s32.totalorder %s27, 1
          %s640 = scalar_select %p639, %s27, 1
          %s641 = smul.addr %s640, 4
          %s642 = smul.addr %s641, 4
          %s643 = scalar_lea.vmem %s9, %s642
        $region68: #{gpt_forward.1} parent=31 // pred_fallthru
          _
        // Predicated region
        $region69: #{gpt_forward.1} parent=31 // pred_check
          %p644 = pneg %p302
        $region70: #{gpt_forward.1} parent=31 // pred_check_branch
          %646 = sbr.rel (%p644) target = $region72
        $region71: #{gpt_forward.1} parent=31 // pred_region
          %p647 = scmp.lt.s32.totalorder %s27, 1
          %s648 = scalar_select %p647, %s27, 1
          %s649 = scalar_lea.vmem %s10, %s648
        $region72: #{gpt_forward.1} parent=31 // pred_fallthru
          _
        // Predicated region
        $region73: #{gpt_forward.1} parent=31 // pred_check
          %p650 = pneg %p328
        $region74: #{gpt_forward.1} parent=31 // pred_check_branch
          %652 = sbr.rel (%p650) target = $region76
        $region75: #{gpt_forward.1} parent=31 // pred_region
          %p653 = scmp.lt.s32.totalorder %s27, 1
          %s654 = scalar_select %p653, %s27, 1
          %s655 = scalar_lea.vmem %s11, %s654
        $region76: #{gpt_forward.1} parent=31 // pred_fallthru
          _
        // Predicated region
        $region77: #{gpt_forward.1} parent=31 // pred_check
          %p656 = pneg %p354
        $region78: #{gpt_forward.1} parent=31 // pred_check_branch
          %658 = sbr.rel (%p656) target = $region80
        $region79: #{gpt_forward.1} parent=31 // pred_region
          %p659 = scmp.lt.s32.totalorder %s27, 1
          %s660 = scalar_select %p659, %s27, 1
          %s661 = scalar_lea.vmem %s12, %s660
        $region80: #{gpt_forward.1} parent=31 // pred_fallthru
          _
        // Predicated region
        $region81: #{gpt_forward.1} parent=31 // pred_check
          %p662 = pneg %p380
        $region82: #{gpt_forward.1} parent=31 // pred_check_branch
          %664 = sbr.rel (%p662) target = $region84
        $region83: #{gpt_forward.1} parent=31 // pred_region
          %p665 = scmp.lt.s32.totalorder %s27, 1
          %s666 = scalar_select %p665, %s27, 1
          %s667 = smul.addr %s666, 4
          %s668 = smul.addr %s667, 4
          %s669 = scalar_lea.vmem %s13, %s668
        $region84: #{gpt_forward.1} parent=31 // pred_fallthru
          _
        // Predicated region
        $region85: #{gpt_forward.1} parent=31 // pred_check
          %p670 = pneg %p406
        $region86: #{gpt_forward.1} parent=31 // pred_check_branch
          %672 = sbr.rel (%p670) target = $region88
        $region87: #{gpt_forward.1} parent=31 // pred_region
          %p673 = scmp.lt.s32.totalorder %s27, 1
          %s674 = scalar_select %p673, %s27, 1
          %s675 = scalar_lea.vmem %s14, %s674
        $region88: #{gpt_forward.1} parent=31 // pred_fallthru
          _
        // Predicated region
        $region89: #{gpt_forward.1} parent=31 // pred_check
          %p676 = pneg %p432
        $region90: #{gpt_forward.1} parent=31 // pred_check_branch
          %678 = sbr.rel (%p676) target = $region92
        $region91: #{gpt_forward.1} parent=31 // pred_region
          %p679 = scmp.lt.s32.totalorder %s27, 1
          %s680 = scalar_select %p679, %s27, 1
          %s681 = smul.addr %s680, 16
          %s682 = smul.addr %s681, 4
          %s683 = scalar_lea.vmem %s15, %s682
        $region92: #{gpt_forward.1} parent=31 // pred_fallthru
          _
        // Predicated region
        $region93: #{gpt_forward.1} parent=31 // pred_check
          %p684 = pneg %p458
        $region94: #{gpt_forward.1} parent=31 // pred_check_branch
          %686 = sbr.rel (%p684) target = $region96
        $region95: #{gpt_forward.1} parent=31 // pred_region
          %p687 = scmp.lt.s32.totalorder %s27, 1
          %s688 = scalar_select %p687, %s27, 1
          %s689 = scalar_lea.vmem %s16, %s688
        $region96: #{gpt_forward.1} parent=31 // pred_fallthru
          _
      $region32: #{gpt_forward.1} parent=5 // pred_fallthru
        _
      %p690 = scmp.le.s32.totalorder 1, %s27
      %p691 = scmp.lt.s32.totalorder %s27, 3
      %p692 = pnand %p690, %p691
      %p693 = pneg %p692
      // Predicated region
      $region97: #{gpt_forward.1} parent=5 // pred_check
        _
      $region98: #{gpt_forward.1} parent=5 // pred_check_branch
        %695 = sbr.rel (%p692) target = $region100
      $region99: #{gpt_forward.1} parent=5 // pred_region
        %s696 = ssub.s32 %s27, 1
        %p697 = pneg %p48
        %p698 = pneg %p45
        %p699 = scmp.lt.s32.totalorder %s32, 1
        %s700 = scalar_select %p699, %s32, 1
        %s701 = scalar_lea.vmem %s1, %s700
        %p702 = pneg %p74
        %p703 = pneg %p71
        %p704 = scmp.lt.s32.totalorder %s32, 1
        %s705 = scalar_select %p704, %s32, 1
        %s706 = scalar_lea.vmem %s2, %s705
        %p707 = pneg %p100
        %p708 = pneg %p97
        %p709 = scmp.lt.s32.totalorder %s32, 1
        %s710 = scalar_select %p709, %s32, 1
        %s711 = smul.addr %s710, 8
        %s712 = smul.addr %s711, 4
        %s713 = scalar_lea.vmem %s3, %s712
        %p714 = pneg %p126
        %p715 = pneg %p123
        %p716 = scmp.lt.s32.totalorder %s32, 1
        %s717 = scalar_select %p716, %s32, 1
        %s718 = smul.addr %s717, 2
        %s719 = scalar_lea.vmem %s4, %s718
        %p720 = pneg %p152
        %p721 = pneg %p149
        %p722 = scmp.lt.s32.totalorder %s32, 1
        %s723 = scalar_select %p722, %s32, 1
        %s724 = smul.addr %s723, 8
        %s725 = smul.addr %s724, 4
        %s726 = scalar_lea.vmem %s5, %s725
        %p727 = pneg %p178
        %p728 = pneg %p175
        %p729 = scmp.lt.s32.totalorder %s32, 1
        %s730 = scalar_select %p729, %s32, 1
        %s731 = smul.addr %s730, 2
        %s732 = scalar_lea.vmem %s6, %s731
        %p733 = pneg %p204
        %p734 = pneg %p201
        %p735 = scmp.lt.s32.totalorder %s32, 1
        %s736 = scalar_select %p735, %s32, 1
        %s737 = smul.addr %s736, 8
        %s738 = smul.addr %s737, 4
        %s739 = scalar_lea.vmem %s7, %s738
        %p740 = pneg %p230
        %p741 = pneg %p227
        %p742 = scmp.lt.s32.totalorder %s32, 1
        %s743 = scalar_select %p742, %s32, 1
        %s744 = smul.addr %s743, 2
        %s745 = scalar_lea.vmem %s8, %s744
        %p746 = pneg %p256
        %p747 = pneg %p253
        %p748 = scmp.lt.s32.totalorder %s32, 1
        %s749 = scalar_select %p748, %s32, 1
        %s750 = smul.addr %s749, 4
        %s751 = smul.addr %s750, 4
        %s752 = scalar_lea.vmem %s9, %s751
        %p753 = pneg %p282
        %p754 = pneg %p279
        %p755 = scmp.lt.s32.totalorder %s32, 1
        %s756 = scalar_select %p755, %s32, 1
        %s757 = scalar_lea.vmem %s10, %s756
        %p758 = pneg %p308
        %p759 = pneg %p305
        %p760 = scmp.lt.s32.totalorder %s32, 1
        %s761 = scalar_select %p760, %s32, 1
        %s762 = scalar_lea.vmem %s11, %s761
        %p763 = pneg %p334
        %p764 = pneg %p331
        %p765 = scmp.lt.s32.totalorder %s32, 1
        %s766 = scalar_select %p765, %s32, 1
        %s767 = scalar_lea.vmem %s12, %s766
        %p768 = pneg %p360
        %p769 = pneg %p357
        %p770 = scmp.lt.s32.totalorder %s32, 1
        %s771 = scalar_select %p770, %s32, 1
        %s772 = smul.addr %s771, 4
        %s773 = smul.addr %s772, 4
        %s774 = scalar_lea.vmem %s13, %s773
        %p775 = pneg %p386
        %p776 = pneg %p383
        %p777 = scmp.lt.s32.totalorder %s32, 1
        %s778 = scalar_select %p777, %s32, 1
        %s779 = scalar_lea.vmem %s14, %s778
        %p780 = pneg %p412
        %p781 = pneg %p409
        %p782 = scmp.lt.s32.totalorder %s32, 1
        %s783 = scalar_select %p782, %s32, 1
        %s784 = smul.addr %s783, 16
        %s785 = smul.addr %s784, 4
        %s786 = scalar_lea.vmem %s15, %s785
        %p787 = pneg %p438
        %p788 = pneg %p435
        %p789 = scmp.lt.s32.totalorder %s32, 1
        %s790 = scalar_select %p789, %s32, 1
        %s791 = scalar_lea.vmem %s16, %s790
        %p792 = pneg %p464
        %p793 = pneg %p461
        %p794 = pneg %p485
        %p795 = pneg %p482
        %p796 = pneg %p506
        %p797 = pneg %p503
        %p798 = pneg %p527
        %p799 = pneg %p524
        %p800 = pneg %p548
        %p801 = pneg %p545
        %p802 = scmp.lt.s32.totalorder %s32, 1
        %s803 = scalar_select %p802, %s32, 1
        %s804 = scalar_lea.vmem %s1, %s803
        %p805 = scmp.lt.s32.totalorder %s32, 1
        %s806 = scalar_select %p805, %s32, 1
        %s807 = scalar_lea.vmem %s2, %s806
        %p808 = scmp.lt.s32.totalorder %s32, 1
        %s809 = scalar_select %p808, %s32, 1
        %s810 = smul.addr %s809, 8
        %s811 = smul.addr %s810, 4
        %s812 = scalar_lea.vmem %s3, %s811
        %p813 = scmp.lt.s32.totalorder %s32, 1
        %s814 = scalar_select %p813, %s32, 1
        %s815 = smul.addr %s814, 2
        %s816 = scalar_lea.vmem %s4, %s815
        %p817 = scmp.lt.s32.totalorder %s32, 1
        %s818 = scalar_select %p817, %s32, 1
        %s819 = smul.addr %s818, 8
        %s820 = smul.addr %s819, 4
        %s821 = scalar_lea.vmem %s5, %s820
        %p822 = scmp.lt.s32.totalorder %s32, 1
        %s823 = scalar_select %p822, %s32, 1
        %s824 = smul.addr %s823, 2
        %s825 = scalar_lea.vmem %s6, %s824
        %p826 = scmp.lt.s32.totalorder %s32, 1
        %s827 = scalar_select %p826, %s32, 1
        %s828 = smul.addr %s827, 8
        %s829 = smul.addr %s828, 4
        %s830 = scalar_lea.vmem %s7, %s829
        %p831 = scmp.lt.s32.totalorder %s32, 1
        %s832 = scalar_select %p831, %s32, 1
        %s833 = smul.addr %s832, 2
        %s834 = scalar_lea.vmem %s8, %s833
        %p835 = scmp.lt.s32.totalorder %s32, 1
        %s836 = scalar_select %p835, %s32, 1
        %s837 = smul.addr %s836, 4
        %s838 = smul.addr %s837, 4
        %s839 = scalar_lea.vmem %s9, %s838
        %p840 = scmp.lt.s32.totalorder %s32, 1
        %s841 = scalar_select %p840, %s32, 1
        %s842 = scalar_lea.vmem %s10, %s841
        %p843 = scmp.lt.s32.totalorder %s32, 1
        %s844 = scalar_select %p843, %s32, 1
        %s845 = scalar_lea.vmem %s11, %s844
        %p846 = scmp.lt.s32.totalorder %s32, 1
        %s847 = scalar_select %p846, %s32, 1
        %s848 = scalar_lea.vmem %s12, %s847
        %p849 = scmp.lt.s32.totalorder %s32, 1
        %s850 = scalar_select %p849, %s32, 1
        %s851 = smul.addr %s850, 4
        %s852 = smul.addr %s851, 4
        %s853 = scalar_lea.vmem %s13, %s852
        %p854 = scmp.lt.s32.totalorder %s32, 1
        %s855 = scalar_select %p854, %s32, 1
        %s856 = scalar_lea.vmem %s14, %s855
        %p857 = scmp.lt.s32.totalorder %s32, 1
        %s858 = scalar_select %p857, %s32, 1
        %s859 = smul.addr %s858, 16
        %s860 = smul.addr %s859, 4
        %s861 = scalar_lea.vmem %s15, %s860
        %p862 = scmp.lt.s32.totalorder %s32, 1
        %s863 = scalar_select %p862, %s32, 1
        %s864 = scalar_lea.vmem %s16, %s863
        %p866 = scmp.eq.s32.totalorder %s32, 0
        // Predicated region
        $region101: #{gpt_forward.1} parent=99 // pred_check
          %p867 = pneg %p866
        $region102: #{gpt_forward.1} parent=99 // pred_check_branch
          %869 = sbr.rel (%p867) target = $region104
        $region103: #{gpt_forward.1} parent=99 // pred_region
          %v870 = vld [vmem:[%s0] sm:$0xff]
          %v871 = vld [vmem:[%s0 + $0x8] sm:$0xff]
          %vm872 = vcmask 261120
          %873 = vst.msk [vmem:[#allocation2] sm:$0xff] %vm872, %v870
          %874 = vst.msk [vmem:[#allocation2 + $0x8] sm:$0xff] %vm872, %v871
        $region104: #{gpt_forward.1} parent=99 // pred_fallthru
          _
        %v875 = vld [vmem:[#allocation2] sm:$0xff]
        %v876 = vld [vmem:[#allocation2 + $0x8] sm:$0xff]
        %v877 = vld [vmem:[%s804] sm:$0x1]
        %v878 = vld [vmem:[%s807] sm:$0x1]
        %vm879 = vcmask 261120
        %v880 = vsel %vm879, %v875, 0.0
        %881 = vadd.xlane.f32.xlu0 %v880
        %v882 = vpop.xlane.xlu0 %881
        %v883 = vsel %vm879, %v876, 0.0
        %884 = vadd.xlane.f32.xlu0 %v883
        %v885 = vpop.xlane.xlu0 %884
        %v886 = vrcp.pop 32.0
        %v887 = vmul.f32 %v882, %v886
        %v888 = vmul.f32 %v885, %v886
        %v889 = vsub.f32 %v875, %v887
        %v890 = vsub.f32 %v876, %v888
        %v891 = vmul.f32 %v889, %v889
        %v892 = vmul.f32 %v890, %v890
        %v893 = vsel %vm879, %v891, 0.0
        %894 = vadd.xlane.f32.xlu0 %v893
        %v895 = vpop.xlane.xlu0 %894
        %v896 = vsel %vm879, %v892, 0.0
        %897 = vadd.xlane.f32.xlu0 %v896
        %v898 = vpop.xlane.xlu0 %897
        %v899 = vmul.f32 %v895, %v886
        %v900 = vmul.f32 %v898, %v886
        %v901 = vadd.f32 %v899, 1e-05
        %v902 = vadd.f32 %v900, 1e-05
        %v903 = vrsqrt.pop %v901
        %v904 = vrsqrt.pop %v902
        %v905 = vmul.f32 %v889, %v903
        %v906 = vmul.f32 %v890, %v904
        %v908 = vlaneseq
        %v909 = vshrl.u32 %v908, 7
        %v910 = vsub.s32 0, %v909
        %v911 = vrot.slane %v877, %v910
        %v913 = vmul.f32 %v905, %v911
        %v914 = vmul.f32 %v906, %v911
        %v916 = vlaneseq
        %v917 = vshrl.u32 %v916, 7
        %v918 = vsub.s32 0, %v917
        %v919 = vrot.slane %v878, %v918
        %v921 = vadd.f32 %v913, %v919
        %v922 = vadd.f32 %v914, %v919
        %v923 = vpack.c.bf16 %v922, %v921
        %v924 = vlaneseq
        %v925 = vshrl.u32 %v924, 7
        %v926 = vlaneseq
        %v927 = vand.u32 %v926, 127
        %vm928 = vcmp.le.s32.totalorder %v927, %v925
        %v929 = vld [vmem:[%s812] sm:$0xf]
        %v930 = vld [vmem:[%s812 + $0x4] sm:$0xf]
        %v931 = vld [vmem:[%s812 + $0x8] sm:$0xf]
        %v932 = vld [vmem:[%s812 + $0xc] sm:$0xf]
        %v933 = vld [vmem:[%s816] sm:$0x1]
        %v935 = vlaneseq
        %v936 = vshrl.u32 %v935, 7
        %v937 = vsub.s32 0, %v936
        %v938 = vrot.slane %v933, %v937
        %v944 = vunpack.c.l.b16 %v929
        %v945 = vunpack.c.l.b16 %v930
        %v946 = vunpack.c.l.b16 %v931
        %v947 = vunpack.c.l.b16 %v932
        %v948 = vpack.c.b16 %v945, %v944
        %v949 = vpack.c.b16 %v947, %v946
        %v953 = vsel %vm879, %v923, 0
        %955 = vmatprep.subr.bf16.mxu0 0
        %956 = vmatpush1.bf16.msra.mxu0 0
        %957 = vmatprep.subr.bf16.mxu0 0
        %958 = vmatpush1.bf16.msra.mxu0 0
        %959 = vmatprep.subr.bf16.mxu0 0
        %960 = vmatpush1.bf16.msra.mxu0 0
        %961 = vmatprep.subr.bf16.mxu0 0
        %962 = vmatpush1.bf16.msra.mxu0 0
        %963 = vmatprep.subr.bf16.mxu0 0
        %964 = vmatpush1.bf16.msra.mxu0 0
        %965 = vmatprep.subr.bf16.mxu0 0
        %966 = vmatpush1.bf16.msra.mxu0 0
        %967 = vmatprep.subr.bf16.mxu0 0
        %968 = vmatpush1.bf16.msra.mxu0 %v949
        %969 = vmatprep.subr.bf16.mxu0 0
        %970 = vmatpush1.bf16.msra.mxu0 %v948
        %971 = vmatprep.subr.bf16.mxu0 0
        %972 = vmatpush2.bf16.msra.mxu0 0
        %973 = vmatprep.subr.bf16.mxu0 0
        %974 = vmatpush2.bf16.msra.mxu0 0
        %975 = vmatprep.subr.bf16.mxu0 0
        %976 = vmatpush2.bf16.msra.mxu0 0
        %977 = vmatprep.subr.bf16.mxu0 0
        %978 = vmatpush2.bf16.msra.mxu0 0
        %979 = vmatprep.subr.bf16.mxu0 0
        %980 = vmatpush2.bf16.msra.mxu0 0
        %981 = vmatprep.subr.bf16.mxu0 0
        %982 = vmatpush2.bf16.msra.mxu0 0
        %983 = vmatprep.subr.bf16.mxu0 0
        %984 = vmatpush2.bf16.msra.mxu0 0
        %985 = vmatprep.subr.bf16.mxu0 0
        %986 = vmatpush2.bf16.msra.mxu0 0
        %987 = vmatprep.mubr.bf16.mxu0 0
        %988 = vmatmul.mubr.bf16.gmra.mxu0 %v953
        %v989 = vpop.f32.mrf.mxu0
        %v990 = vadd.f32 %v938, %v989
        %v991 = vpop.f32.mrf.mxu0
        %v992 = vpop.f32.mrf.mxu0
        %v993 = vadd.f32 %v938, %v992
        %v994 = vpop.f32.mrf.mxu0
        %995 = vdwg.mxu0
        %v996 = vld [vmem:[%s821] sm:$0xf]
        %v997 = vld [vmem:[%s821 + $0x4] sm:$0xf]
        %v998 = vld [vmem:[%s821 + $0x8] sm:$0xf]
        %v999 = vld [vmem:[%s821 + $0xc] sm:$0xf]
        %v1000 = vld [vmem:[%s825] sm:$0x1]
        %v1002 = vlaneseq
        %v1003 = vshrl.u32 %v1002, 7
        %v1004 = vsub.s32 0, %v1003
        %v1005 = vrot.slane %v1000, %v1004
        %v1011 = vunpack.c.l.b16 %v996
        %v1012 = vunpack.c.l.b16 %v997
        %v1013 = vunpack.c.l.b16 %v998
        %v1014 = vunpack.c.l.b16 %v999
        %v1015 = vpack.c.b16 %v1012, %v1011
        %v1016 = vpack.c.b16 %v1014, %v1013
        %1019 = vmatprep.subr.bf16.mxu0 0
        %1020 = vmatpush1.bf16.msra.mxu0 0
        %1021 = vmatprep.subr.bf16.mxu0 0
        %1022 = vmatpush1.bf16.msra.mxu0 0
        %1023 = vmatprep.subr.bf16.mxu0 0
        %1024 = vmatpush1.bf16.msra.mxu0 0
        %1025 = vmatprep.subr.bf16.mxu0 0
        %1026 = vmatpush1.bf16.msra.mxu0 0
        %1027 = vmatprep.subr.bf16.mxu0 0
        %1028 = vmatpush1.bf16.msra.mxu0 0
        %1029 = vmatprep.subr.bf16.mxu0 0
        %1030 = vmatpush1.bf16.msra.mxu0 0
        %1031 = vmatprep.subr.bf16.mxu0 0
        %1032 = vmatpush1.bf16.msra.mxu0 %v1016
        %1033 = vmatprep.subr.bf16.mxu0 0
        %1034 = vmatpush1.bf16.msra.mxu0 %v1015
        %1035 = vmatprep.subr.bf16.mxu0 0
        %1036 = vmatpush2.bf16.msra.mxu0 0
        %1037 = vmatprep.subr.bf16.mxu0 0
        %1038 = vmatpush2.bf16.msra.mxu0 0
        %1039 = vmatprep.subr.bf16.mxu0 0
        %1040 = vmatpush2.bf16.msra.mxu0 0
        %1041 = vmatprep.subr.bf16.mxu0 0
        %1042 = vmatpush2.bf16.msra.mxu0 0
        %1043 = vmatprep.subr.bf16.mxu0 0
        %1044 = vmatpush2.bf16.msra.mxu0 0
        %1045 = vmatprep.subr.bf16.mxu0 0
        %1046 = vmatpush2.bf16.msra.mxu0 0
        %1047 = vmatprep.subr.bf16.mxu0 0
        %1048 = vmatpush2.bf16.msra.mxu0 0
        %1049 = vmatprep.subr.bf16.mxu0 0
        %1050 = vmatpush2.bf16.msra.mxu0 0
        %1051 = vmatprep.mubr.bf16.mxu0 0
        %1052 = vmatmul.mubr.bf16.gmra.mxu0 %v953
        %v1053 = vpop.f32.mrf.mxu0
        %v1054 = vadd.f32 %v1005, %v1053
        %v1055 = vpop.f32.mrf.mxu0
        %v1056 = vpop.f32.mrf.mxu0
        %v1057 = vadd.f32 %v1005, %v1056
        %v1058 = vpop.f32.mrf.mxu0
        %1059 = vdwg.mxu0
        %v1060 = vld [vmem:[%s830] sm:$0xf]
        %v1061 = vld [vmem:[%s830 + $0x4] sm:$0xf]
        %v1062 = vld [vmem:[%s830 + $0x8] sm:$0xf]
        %v1063 = vld [vmem:[%s830 + $0xc] sm:$0xf]
        %v1064 = vld [vmem:[%s834] sm:$0x1]
        %v1066 = vlaneseq
        %v1067 = vshrl.u32 %v1066, 7
        %v1068 = vsub.s32 0, %v1067
        %v1069 = vrot.slane %v1064, %v1068
        %v1075 = vunpack.c.l.b16 %v1060
        %v1076 = vunpack.c.l.b16 %v1061
        %v1077 = vunpack.c.l.b16 %v1062
        %v1078 = vunpack.c.l.b16 %v1063
        %v1079 = vpack.c.b16 %v1076, %v1075
        %v1080 = vpack.c.b16 %v1078, %v1077
        %1083 = vmatprep.subr.bf16.mxu0 0
        %1084 = vmatpush1.bf16.msra.mxu0 0
        %1085 = vmatprep.subr.bf16.mxu0 0
        %1086 = vmatpush1.bf16.msra.mxu0 0
        %1087 = vmatprep.subr.bf16.mxu0 0
        %1088 = vmatpush1.bf16.msra.mxu0 0
        %1089 = vmatprep.subr.bf16.mxu0 0
        %1090 = vmatpush1.bf16.msra.mxu0 0
        %1091 = vmatprep.subr.bf16.mxu0 0
        %1092 = vmatpush1.bf16.msra.mxu0 0
        %1093 = vmatprep.subr.bf16.mxu0 0
        %1094 = vmatpush1.bf16.msra.mxu0 0
        %1095 = vmatprep.subr.bf16.mxu0 0
        %1096 = vmatpush1.bf16.msra.mxu0 %v1080
        %1097 = vmatprep.subr.bf16.mxu0 0
        %1098 = vmatpush1.bf16.msra.mxu0 %v1079
        %1099 = vmatprep.subr.bf16.mxu0 0
        %1100 = vmatpush2.bf16.msra.mxu0 0
        %1101 = vmatprep.subr.bf16.mxu0 0
        %1102 = vmatpush2.bf16.msra.mxu0 0
        %1103 = vmatprep.subr.bf16.mxu0 0
        %1104 = vmatpush2.bf16.msra.mxu0 0
        %1105 = vmatprep.subr.bf16.mxu0 0
        %1106 = vmatpush2.bf16.msra.mxu0 0
        %1107 = vmatprep.subr.bf16.mxu0 0
        %1108 = vmatpush2.bf16.msra.mxu0 0
        %1109 = vmatprep.subr.bf16.mxu0 0
        %1110 = vmatpush2.bf16.msra.mxu0 0
        %1111 = vmatprep.subr.bf16.mxu0 0
        %1112 = vmatpush2.bf16.msra.mxu0 0
        %1113 = vmatprep.subr.bf16.mxu0 0
        %1114 = vmatpush2.bf16.msra.mxu0 0
        %1115 = vmatprep.mubr.bf16.mxu0 0
        %1116 = vmatmul.mubr.bf16.gmra.mxu0 %v953
        %v1117 = vpop.f32.mrf.mxu0
        %v1118 = vadd.f32 %v1069, %v1117
        %v1119 = vpop.f32.mrf.mxu0
        %v1120 = vpop.f32.mrf.mxu0
        %v1121 = vadd.f32 %v1069, %v1120
        %v1122 = vpop.f32.mrf.mxu0
        %1123 = vdwg.mxu0
        %v1124 = vpack.c.bf16 %v990, %v990
        %v1125 = vpack.c.bf16 %v993, %v993
        %v1126 = vpack.c.bf16 %v1054, %v1054
        %v1127 = vpack.c.bf16 %v1057, %v1057
        %vm1128 = vcmask 130048
        %v1130 = vsel %vm1128, %v1124, 0
        %v1133 = vsel %vm1128, %v1126, 0
        %1135 = vmatprep.subr.bf16.mxu0 0
        %1136 = vmatpush1.bf16.xpose.msra.mxu0 0
        %1137 = vmatprep.subr.bf16.mxu0 0
        %1138 = vmatpush1.bf16.xpose.msra.mxu0 0
        %1139 = vmatprep.subr.bf16.mxu0 0
        %1140 = vmatpush1.bf16.xpose.msra.mxu0 0
        %1141 = vmatprep.subr.bf16.mxu0 0
        %1142 = vmatpush1.bf16.xpose.msra.mxu0 0
        %1143 = vmatprep.subr.bf16.mxu0 0
        %1144 = vmatpush1.bf16.xpose.msra.mxu0 0
        %1145 = vmatprep.subr.bf16.mxu0 0
        %1146 = vmatpush1.bf16.xpose.msra.mxu0 0
        %1147 = vmatprep.subr.bf16.mxu0 0
        %1148 = vmatpush1.bf16.xpose.msra.mxu0 0
        %1149 = vmatprep.subr.bf16.mxu0 0
        %1150 = vmatpush1.bf16.xpose.msra.mxu0 %v1133
        %1151 = vmatprep.subr.bf16.mxu0 0
        %1152 = vmatpush2.bf16.xpose.msra.mxu0 0
        %1153 = vmatprep.subr.bf16.mxu0 0
        %1154 = vmatpush2.bf16.xpose.msra.mxu0 0
        %1155 = vmatprep.subr.bf16.mxu0 0
        %1156 = vmatpush2.bf16.xpose.msra.mxu0 0
        %1157 = vmatprep.subr.bf16.mxu0 0
        %1158 = vmatpush2.bf16.xpose.msra.mxu0 0
        %1159 = vmatprep.subr.bf16.mxu0 0
        %1160 = vmatpush2.bf16.xpose.msra.mxu0 0
        %1161 = vmatprep.subr.bf16.mxu0 0
        %1162 = vmatpush2.bf16.xpose.msra.mxu0 0
        %1163 = vmatprep.subr.bf16.mxu0 0
        %1164 = vmatpush2.bf16.xpose.msra.mxu0 0
        %1165 = vmatprep.subr.bf16.mxu0 0
        %1166 = vmatpush2.bf16.xpose.msra.mxu0 0
        %1167 = vmatprep.mubr.bf16.mxu0 0
        %1168 = vmatmul.mubr.bf16.gmra.mxu0 %v1130
        %v1169 = vpop.f32.mrf.mxu0
        %v1170 = vadd.f32 0.0, %v1169
        %v1171 = vpop.f32.mrf.mxu0
        %v1172 = vpop.f32.mrf.mxu0
        %v1173 = vpop.f32.mrf.mxu0
        %1174 = vdwg.mxu0
        %v1176 = vsel %vm1128, %v1125, 0
        %v1179 = vsel %vm1128, %v1127, 0
        %1181 = vmatprep.subr.bf16.mxu0 0
        %1182 = vmatpush1.bf16.xpose.msra.mxu0 0
        %1183 = vmatprep.subr.bf16.mxu0 0
        %1184 = vmatpush1.bf16.xpose.msra.mxu0 0
        %1185 = vmatprep.subr.bf16.mxu0 0
        %1186 = vmatpush1.bf16.xpose.msra.mxu0 0
        %1187 = vmatprep.subr.bf16.mxu0 0
        %1188 = vmatpush1.bf16.xpose.msra.mxu0 0
        %1189 = vmatprep.subr.bf16.mxu0 0
        %1190 = vmatpush1.bf16.xpose.msra.mxu0 0
        %1191 = vmatprep.subr.bf16.mxu0 0
        %1192 = vmatpush1.bf16.xpose.msra.mxu0 0
        %1193 = vmatprep.subr.bf16.mxu0 0
        %1194 = vmatpush1.bf16.xpose.msra.mxu0 0
        %1195 = vmatprep.subr.bf16.mxu0 0
        %1196 = vmatpush1.bf16.xpose.msra.mxu0 %v1179
        %1197 = vmatprep.subr.bf16.mxu0 0
        %1198 = vmatpush2.bf16.xpose.msra.mxu0 0
        %1199 = vmatprep.subr.bf16.mxu0 0
        %1200 = vmatpush2.bf16.xpose.msra.mxu0 0
        %1201 = vmatprep.subr.bf16.mxu0 0
        %1202 = vmatpush2.bf16.xpose.msra.mxu0 0
        %1203 = vmatprep.subr.bf16.mxu0 0
        %1204 = vmatpush2.bf16.xpose.msra.mxu0 0
        %1205 = vmatprep.subr.bf16.mxu0 0
        %1206 = vmatpush2.bf16.xpose.msra.mxu0 0
        %1207 = vmatprep.subr.bf16.mxu0 0
        %1208 = vmatpush2.bf16.xpose.msra.mxu0 0
        %1209 = vmatprep.subr.bf16.mxu0 0
        %1210 = vmatpush2.bf16.xpose.msra.mxu0 0
        %1211 = vmatprep.subr.bf16.mxu0 0
        %1212 = vmatpush2.bf16.xpose.msra.mxu0 0
        %1213 = vmatprep.mubr.bf16.mxu0 0
        %1214 = vmatmul.mubr.bf16.gmra.mxu0 %v1176
        %v1215 = vpop.f32.mrf.mxu0
        %v1216 = vadd.f32 0.0, %v1215
        %v1217 = vpop.f32.mrf.mxu0
        %v1218 = vpop.f32.mrf.mxu0
        %v1219 = vpop.f32.mrf.mxu0
        %1220 = vdwg.mxu0
        %v1221 = vsel %vm928, 1, 0
        %vm1222 = vcmp.eq.s32.totalorder %v1221, 1
        %v1223 = vsel %vm1222, %v1170, -1e+30
        %v1224 = vsel %vm1222, %v1216, -1e+30
        %vm1225 = vcmask 64512
        %v1226 = vsel %vm1225, %v1223, -inf
        %1227 = vmax.xlane.f32.xlu0 %v1226
        %v1228 = vpop.xlane.xlu0 %1227
        %v1229 = vsel %vm1225, %v1224, -inf
        %1230 = vmax.xlane.f32.xlu0 %v1229
        %v1231 = vpop.xlane.xlu0 %1230
        %v1232 = vsub.f32 %v1223, %v1228
        %v1233 = vsub.f32 %v1224, %v1231
        %v1234 = vmul.f32 %v1232, 1.442695
        %v1235 = vpow.pop %v1234
        %v1236 = vmul.f32 %v1233, 1.442695
        %v1237 = vpow.pop %v1236
        %v1238 = vsel %vm1225, %v1235, 0.0
        %1239 = vadd.xlane.f32.xlu0 %v1238
        %v1240 = vpop.xlane.xlu0 %1239
        %v1241 = vsel %vm1225, %v1237, 0.0
        %1242 = vadd.xlane.f32.xlu0 %v1241
        %v1243 = vpop.xlane.xlu0 %1242
        %v1244 = vrcp.pop %v1240
        %v1245 = vrcp.pop %v1243
        %v1246 = vmul.f32 %v1235, %v1244
        %v1247 = vmul.f32 %v1237, %v1245
        %v1248 = vpack.c.bf16 %v1246, %v1246
        %v1249 = vpack.c.bf16 %v1247, %v1247
        %v1250 = vpack.c.bf16 %v1118, %v1118
        %v1251 = vpack.c.bf16 %v1121, %v1121
        %v1253 = vsel %vm1225, %v1248, 0
        %vm1255 = vcmask 1043456
        %v1257 = vsel %vm1255, %v1250, 0
        %1259 = vmatprep.subr.bf16.mxu0 0
        %1260 = vmatpush1.bf16.msra.mxu0 0
        %1261 = vmatprep.subr.bf16.mxu0 0
        %1262 = vmatpush1.bf16.msra.mxu0 0
        %1263 = vmatprep.subr.bf16.mxu0 0
        %1264 = vmatpush1.bf16.msra.mxu0 0
        %1265 = vmatprep.subr.bf16.mxu0 0
        %1266 = vmatpush1.bf16.msra.mxu0 0
        %1267 = vmatprep.subr.bf16.mxu0 0
        %1268 = vmatpush1.bf16.msra.mxu0 0
        %1269 = vmatprep.subr.bf16.mxu0 0
        %1270 = vmatpush1.bf16.msra.mxu0 0
        %1271 = vmatprep.subr.bf16.mxu0 0
        %1272 = vmatpush1.bf16.msra.mxu0 0
        %1273 = vmatprep.subr.bf16.mxu0 0
        %1274 = vmatpush1.bf16.msra.mxu0 %v1257
        %1275 = vmatprep.subr.bf16.mxu0 0
        %1276 = vmatpush2.bf16.msra.mxu0 0
        %1277 = vmatprep.subr.bf16.mxu0 0
        %1278 = vmatpush2.bf16.msra.mxu0 0
        %1279 = vmatprep.subr.bf16.mxu0 0
        %1280 = vmatpush2.bf16.msra.mxu0 0
        %1281 = vmatprep.subr.bf16.mxu0 0
        %1282 = vmatpush2.bf16.msra.mxu0 0
        %1283 = vmatprep.subr.bf16.mxu0 0
        %1284 = vmatpush2.bf16.msra.mxu0 0
        %1285 = vmatprep.subr.bf16.mxu0 0
        %1286 = vmatpush2.bf16.msra.mxu0 0
        %1287 = vmatprep.subr.bf16.mxu0 0
        %1288 = vmatpush2.bf16.msra.mxu0 0
        %1289 = vmatprep.subr.bf16.mxu0 0
        %1290 = vmatpush2.bf16.msra.mxu0 0
        %1291 = vmatprep.mubr.bf16.mxu0 0
        %1292 = vmatmul.mubr.bf16.gmra.mxu0 %v1253
        %v1293 = vpop.f32.mrf.mxu0
        %v1294 = vadd.f32 0.0, %v1293
        %v1295 = vpop.f32.mrf.mxu0
        %v1296 = vpop.f32.mrf.mxu0
        %v1297 = vpop.f32.mrf.mxu0
        %1298 = vdwg.mxu0
        %v1300 = vsel %vm1225, %v1249, 0
        %v1303 = vsel %vm1255, %v1251, 0
        %1305 = vmatprep.subr.bf16.mxu0 0
        %1306 = vmatpush1.bf16.msra.mxu0 0
        %1307 = vmatprep.subr.bf16.mxu0 0
        %1308 = vmatpush1.bf16.msra.mxu0 0
        %1309 = vmatprep.subr.bf16.mxu0 0
        %1310 = vmatpush1.bf16.msra.mxu0 0
        %1311 = vmatprep.subr.bf16.mxu0 0
        %1312 = vmatpush1.bf16.msra.mxu0 0
        %1313 = vmatprep.subr.bf16.mxu0 0
        %1314 = vmatpush1.bf16.msra.mxu0 0
        %1315 = vmatprep.subr.bf16.mxu0 0
        %1316 = vmatpush1.bf16.msra.mxu0 0
        %1317 = vmatprep.subr.bf16.mxu0 0
        %1318 = vmatpush1.bf16.msra.mxu0 0
        %1319 = vmatprep.subr.bf16.mxu0 0
        %1320 = vmatpush1.bf16.msra.mxu0 %v1303
        %1321 = vmatprep.subr.bf16.mxu0 0
        %1322 = vmatpush2.bf16.msra.mxu0 0
        %1323 = vmatprep.subr.bf16.mxu0 0
        %1324 = vmatpush2.bf16.msra.mxu0 0
        %1325 = vmatprep.subr.bf16.mxu0 0
        %1326 = vmatpush2.bf16.msra.mxu0 0
        %1327 = vmatprep.subr.bf16.mxu0 0
        %1328 = vmatpush2.bf16.msra.mxu0 0
        %1329 = vmatprep.subr.bf16.mxu0 0
        %1330 = vmatpush2.bf16.msra.mxu0 0
        %1331 = vmatprep.subr.bf16.mxu0 0
        %1332 = vmatpush2.bf16.msra.mxu0 0
        %1333 = vmatprep.subr.bf16.mxu0 0
        %1334 = vmatpush2.bf16.msra.mxu0 0
        %1335 = vmatprep.subr.bf16.mxu0 0
        %1336 = vmatpush2.bf16.msra.mxu0 0
        %1337 = vmatprep.mubr.bf16.mxu0 0
        %1338 = vmatmul.mubr.bf16.gmra.mxu0 %v1300
        %v1339 = vpop.f32.mrf.mxu0
        %v1340 = vadd.f32 0.0, %v1339
        %v1341 = vpop.f32.mrf.mxu0
        %v1342 = vpop.f32.mrf.mxu0
        %v1343 = vpop.f32.mrf.mxu0
        %1344 = vdwg.mxu0
        %v1345 = vpack.c.bf16 %v1340, %v1294
        %v1346 = vld [vmem:[%s839] sm:$0xf]
        %v1347 = vld [vmem:[%s839 + $0x4] sm:$0xf]
        %s1348 = scalar_lea.vmem %s812, 16
        %v1349 = vld [vmem:[%s1348] sm:$0xf]
        %v1350 = vld [vmem:[%s1348 + $0x4] sm:$0xf]
        %v1351 = vld [vmem:[%s1348 + $0x8] sm:$0xf]
        %v1352 = vld [vmem:[%s1348 + $0xc] sm:$0xf]
        %s1353 = scalar_lea.vmem %s816, 1
        %v1354 = vld [vmem:[%s1353] sm:$0x1]
        %v1356 = vlaneseq
        %v1357 = vshrl.u32 %v1356, 7
        %v1358 = vsub.s32 0, %v1357
        %v1359 = vrot.slane %v1354, %v1358
        %v1365 = vunpack.c.l.b16 %v1349
        %v1366 = vunpack.c.l.b16 %v1350
        %v1367 = vunpack.c.l.b16 %v1351
        %v1368 = vunpack.c.l.b16 %v1352
        %v1369 = vpack.c.b16 %v1366, %v1365
        %v1370 = vpack.c.b16 %v1368, %v1367
        %1373 = vmatprep.subr.bf16.mxu0 0
        %1374 = vmatpush1.bf16.msra.mxu0 0
        %1375 = vmatprep.subr.bf16.mxu0 0
        %1376 = vmatpush1.bf16.msra.mxu0 0
        %1377 = vmatprep.subr.bf16.mxu0 0
        %1378 = vmatpush1.bf16.msra.mxu0 0
        %1379 = vmatprep.subr.bf16.mxu0 0
        %1380 = vmatpush1.bf16.msra.mxu0 0
        %1381 = vmatprep.subr.bf16.mxu0 0
        %1382 = vmatpush1.bf16.msra.mxu0 0
        %1383 = vmatprep.subr.bf16.mxu0 0
        %1384 = vmatpush1.bf16.msra.mxu0 0
        %1385 = vmatprep.subr.bf16.mxu0 0
        %1386 = vmatpush1.bf16.msra.mxu0 %v1370
        %1387 = vmatprep.subr.bf16.mxu0 0
        %1388 = vmatpush1.bf16.msra.mxu0 %v1369
        %1389 = vmatprep.subr.bf16.mxu0 0
        %1390 = vmatpush2.bf16.msra.mxu0 0
        %1391 = vmatprep.subr.bf16.mxu0 0
        %1392 = vmatpush2.bf16.msra.mxu0 0
        %1393 = vmatprep.subr.bf16.mxu0 0
        %1394 = vmatpush2.bf16.msra.mxu0 0
        %1395 = vmatprep.subr.bf16.mxu0 0
        %1396 = vmatpush2.bf16.msra.mxu0 0
        %1397 = vmatprep.subr.bf16.mxu0 0
        %1398 = vmatpush2.bf16.msra.mxu0 0
        %1399 = vmatprep.subr.bf16.mxu0 0
        %1400 = vmatpush2.bf16.msra.mxu0 0
        %1401 = vmatprep.subr.bf16.mxu0 0
        %1402 = vmatpush2.bf16.msra.mxu0 0
        %1403 = vmatprep.subr.bf16.mxu0 0
        %1404 = vmatpush2.bf16.msra.mxu0 0
        %1405 = vmatprep.mubr.bf16.mxu0 0
        %1406 = vmatmul.mubr.bf16.gmra.mxu0 %v953
        %v1407 = vpop.f32.mrf.mxu0
        %v1408 = vadd.f32 %v1359, %v1407
        %v1409 = vpop.f32.mrf.mxu0
        %v1410 = vpop.f32.mrf.mxu0
        %v1411 = vadd.f32 %v1359, %v1410
        %v1412 = vpop.f32.mrf.mxu0
        %1413 = vdwg.mxu0
        %s1414 = scalar_lea.vmem %s821, 16
        %v1415 = vld [vmem:[%s1414] sm:$0xf]
        %v1416 = vld [vmem:[%s1414 + $0x4] sm:$0xf]
        %v1417 = vld [vmem:[%s1414 + $0x8] sm:$0xf]
        %v1418 = vld [vmem:[%s1414 + $0xc] sm:$0xf]
        %s1419 = scalar_lea.vmem %s825, 1
        %v1420 = vld [vmem:[%s1419] sm:$0x1]
        %v1422 = vlaneseq
        %v1423 = vshrl.u32 %v1422, 7
        %v1424 = vsub.s32 0, %v1423
        %v1425 = vrot.slane %v1420, %v1424
        %v1431 = vunpack.c.l.b16 %v1415
        %v1432 = vunpack.c.l.b16 %v1416
        %v1433 = vunpack.c.l.b16 %v1417
        %v1434 = vunpack.c.l.b16 %v1418
        %v1435 = vpack.c.b16 %v1432, %v1431
        %v1436 = vpack.c.b16 %v1434, %v1433
        %1439 = vmatprep.subr.bf16.mxu0 0
        %1440 = vmatpush1.bf16.msra.mxu0 0
        %1441 = vmatprep.subr.bf16.mxu0 0
        %1442 = vmatpush1.bf16.msra.mxu0 0
        %1443 = vmatprep.subr.bf16.mxu0 0
        %1444 = vmatpush1.bf16.msra.mxu0 0
        %1445 = vmatprep.subr.bf16.mxu0 0
        %1446 = vmatpush1.bf16.msra.mxu0 0
        %1447 = vmatprep.subr.bf16.mxu0 0
        %1448 = vmatpush1.bf16.msra.mxu0 0
        %1449 = vmatprep.subr.bf16.mxu0 0
        %1450 = vmatpush1.bf16.msra.mxu0 0
        %1451 = vmatprep.subr.bf16.mxu0 0
        %1452 = vmatpush1.bf16.msra.mxu0 %v1436
        %1453 = vmatprep.subr.bf16.mxu0 0
        %1454 = vmatpush1.bf16.msra.mxu0 %v1435
        %1455 = vmatprep.subr.bf16.mxu0 0
        %1456 = vmatpush2.bf16.msra.mxu0 0
        %1457 = vmatprep.subr.bf16.mxu0 0
        %1458 = vmatpush2.bf16.msra.mxu0 0
        %1459 = vmatprep.subr.bf16.mxu0 0
        %1460 = vmatpush2.bf16.msra.mxu0 0
        %1461 = vmatprep.subr.bf16.mxu0 0
        %1462 = vmatpush2.bf16.msra.mxu0 0
        %1463 = vmatprep.subr.bf16.mxu0 0
        %1464 = vmatpush2.bf16.msra.mxu0 0
        %1465 = vmatprep.subr.bf16.mxu0 0
        %1466 = vmatpush2.bf16.msra.mxu0 0
        %1467 = vmatprep.subr.bf16.mxu0 0
        %1468 = vmatpush2.bf16.msra.mxu0 0
        %1469 = vmatprep.subr.bf16.mxu0 0
        %1470 = vmatpush2.bf16.msra.mxu0 0
        %1471 = vmatprep.mubr.bf16.mxu0 0
        %1472 = vmatmul.mubr.bf16.gmra.mxu0 %v953
        %v1473 = vpop.f32.mrf.mxu0
        %v1474 = vadd.f32 %v1425, %v1473
        %v1475 = vpop.f32.mrf.mxu0
        %v1476 = vpop.f32.mrf.mxu0
        %v1477 = vadd.f32 %v1425, %v1476
        %v1478 = vpop.f32.mrf.mxu0
        %1479 = vdwg.mxu0
        %s1480 = scalar_lea.vmem %s830, 16
        %v1481 = vld [vmem:[%s1480] sm:$0xf]
        %v1482 = vld [vmem:[%s1480 + $0x4] sm:$0xf]
        %v1483 = vld [vmem:[%s1480 + $0x8] sm:$0xf]
        %v1484 = vld [vmem:[%s1480 + $0xc] sm:$0xf]
        %s1485 = scalar_lea.vmem %s834, 1
        %v1486 = vld [vmem:[%s1485] sm:$0x1]
        %v1488 = vlaneseq
        %v1489 = vshrl.u32 %v1488, 7
        %v1490 = vsub.s32 0, %v1489
        %v1491 = vrot.slane %v1486, %v1490
        %v1497 = vunpack.c.l.b16 %v1481
        %v1498 = vunpack.c.l.b16 %v1482
        %v1499 = vunpack.c.l.b16 %v1483
        %v1500 = vunpack.c.l.b16 %v1484
        %v1501 = vpack.c.b16 %v1498, %v1497
        %v1502 = vpack.c.b16 %v1500, %v1499
        %1505 = vmatprep.subr.bf16.mxu0 0
        %1506 = vmatpush1.bf16.msra.mxu0 0
        %1507 = vmatprep.subr.bf16.mxu0 0
        %1508 = vmatpush1.bf16.msra.mxu0 0
        %1509 = vmatprep.subr.bf16.mxu0 0
        %1510 = vmatpush1.bf16.msra.mxu0 0
        %1511 = vmatprep.subr.bf16.mxu0 0
        %1512 = vmatpush1.bf16.msra.mxu0 0
        %1513 = vmatprep.subr.bf16.mxu0 0
        %1514 = vmatpush1.bf16.msra.mxu0 0
        %1515 = vmatprep.subr.bf16.mxu0 0
        %1516 = vmatpush1.bf16.msra.mxu0 0
        %1517 = vmatprep.subr.bf16.mxu0 0
        %1518 = vmatpush1.bf16.msra.mxu0 %v1502
        %1519 = vmatprep.subr.bf16.mxu0 0
        %1520 = vmatpush1.bf16.msra.mxu0 %v1501
        %1521 = vmatprep.subr.bf16.mxu0 0
        %1522 = vmatpush2.bf16.msra.mxu0 0
        %1523 = vmatprep.subr.bf16.mxu0 0
        %1524 = vmatpush2.bf16.msra.mxu0 0
        %1525 = vmatprep.subr.bf16.mxu0 0
        %1526 = vmatpush2.bf16.msra.mxu0 0
        %1527 = vmatprep.subr.bf16.mxu0 0
        %1528 = vmatpush2.bf16.msra.mxu0 0
        %1529 = vmatprep.subr.bf16.mxu0 0
        %1530 = vmatpush2.bf16.msra.mxu0 0
        %1531 = vmatprep.subr.bf16.mxu0 0
        %1532 = vmatpush2.bf16.msra.mxu0 0
        %1533 = vmatprep.subr.bf16.mxu0 0
        %1534 = vmatpush2.bf16.msra.mxu0 0
        %1535 = vmatprep.subr.bf16.mxu0 0
        %1536 = vmatpush2.bf16.msra.mxu0 0
        %1537 = vmatprep.mubr.bf16.mxu0 0
        %1538 = vmatmul.mubr.bf16.gmra.mxu0 %v953
        %v1539 = vpop.f32.mrf.mxu0
        %v1540 = vadd.f32 %v1491, %v1539
        %v1541 = vpop.f32.mrf.mxu0
        %v1542 = vpop.f32.mrf.mxu0
        %v1543 = vadd.f32 %v1491, %v1542
        %v1544 = vpop.f32.mrf.mxu0
        %1545 = vdwg.mxu0
        %v1546 = vpack.c.bf16 %v1408, %v1408
        %v1547 = vpack.c.bf16 %v1411, %v1411
        %v1548 = vpack.c.bf16 %v1474, %v1474
        %v1549 = vpack.c.bf16 %v1477, %v1477
        %v1551 = vsel %vm1128, %v1546, 0
        %v1554 = vsel %vm1128, %v1548, 0
        %1556 = vmatprep.subr.bf16.mxu0 0
        %1557 = vmatpush1.bf16.xpose.msra.mxu0 0
        %1558 = vmatprep.subr.bf16.mxu0 0
        %1559 = vmatpush1.bf16.xpose.msra.mxu0 0
        %1560 = vmatprep.subr.bf16.mxu0 0
        %1561 = vmatpush1.bf16.xpose.msra.mxu0 0
        %1562 = vmatprep.subr.bf16.mxu0 0
        %1563 = vmatpush1.bf16.xpose.msra.mxu0 0
        %1564 = vmatprep.subr.bf16.mxu0 0
        %1565 = vmatpush1.bf16.xpose.msra.mxu0 0
        %1566 = vmatprep.subr.bf16.mxu0 0
        %1567 = vmatpush1.bf16.xpose.msra.mxu0 0
        %1568 = vmatprep.subr.bf16.mxu0 0
        %1569 = vmatpush1.bf16.xpose.msra.mxu0 0
        %1570 = vmatprep.subr.bf16.mxu0 0
        %1571 = vmatpush1.bf16.xpose.msra.mxu0 %v1554
        %1572 = vmatprep.subr.bf16.mxu0 0
        %1573 = vmatpush2.bf16.xpose.msra.mxu0 0
        %1574 = vmatprep.subr.bf16.mxu0 0
        %1575 = vmatpush2.bf16.xpose.msra.mxu0 0
        %1576 = vmatprep.subr.bf16.mxu0 0
        %1577 = vmatpush2.bf16.xpose.msra.mxu0 0
        %1578 = vmatprep.subr.bf16.mxu0 0
        %1579 = vmatpush2.bf16.xpose.msra.mxu0 0
        %1580 = vmatprep.subr.bf16.mxu0 0
        %1581 = vmatpush2.bf16.xpose.msra.mxu0 0
        %1582 = vmatprep.subr.bf16.mxu0 0
        %1583 = vmatpush2.bf16.xpose.msra.mxu0 0
        %1584 = vmatprep.subr.bf16.mxu0 0
        %1585 = vmatpush2.bf16.xpose.msra.mxu0 0
        %1586 = vmatprep.subr.bf16.mxu0 0
        %1587 = vmatpush2.bf16.xpose.msra.mxu0 0
        %1588 = vmatprep.mubr.bf16.mxu0 0
        %1589 = vmatmul.mubr.bf16.gmra.mxu0 %v1551
        %v1590 = vpop.f32.mrf.mxu0
        %v1591 = vadd.f32 0.0, %v1590
        %v1592 = vpop.f32.mrf.mxu0
        %v1593 = vpop.f32.mrf.mxu0
        %v1594 = vpop.f32.mrf.mxu0
        %1595 = vdwg.mxu0
        %v1597 = vsel %vm1128, %v1547, 0
        %v1600 = vsel %vm1128, %v1549, 0
        %1602 = vmatprep.subr.bf16.mxu0 0
        %1603 = vmatpush1.bf16.xpose.msra.mxu0 0
        %1604 = vmatprep.subr.bf16.mxu0 0
        %1605 = vmatpush1.bf16.xpose.msra.mxu0 0
        %1606 = vmatprep.subr.bf16.mxu0 0
        %1607 = vmatpush1.bf16.xpose.msra.mxu0 0
        %1608 = vmatprep.subr.bf16.mxu0 0
        %1609 = vmatpush1.bf16.xpose.msra.mxu0 0
        %1610 = vmatprep.subr.bf16.mxu0 0
        %1611 = vmatpush1.bf16.xpose.msra.mxu0 0
        %1612 = vmatprep.subr.bf16.mxu0 0
        %1613 = vmatpush1.bf16.xpose.msra.mxu0 0
        %1614 = vmatprep.subr.bf16.mxu0 0
        %1615 = vmatpush1.bf16.xpose.msra.mxu0 0
        %1616 = vmatprep.subr.bf16.mxu0 0
        %1617 = vmatpush1.bf16.xpose.msra.mxu0 %v1600
        %1618 = vmatprep.subr.bf16.mxu0 0
        %1619 = vmatpush2.bf16.xpose.msra.mxu0 0
        %1620 = vmatprep.subr.bf16.mxu0 0
        %1621 = vmatpush2.bf16.xpose.msra.mxu0 0
        %1622 = vmatprep.subr.bf16.mxu0 0
        %1623 = vmatpush2.bf16.xpose.msra.mxu0 0
        %1624 = vmatprep.subr.bf16.mxu0 0
        %1625 = vmatpush2.bf16.xpose.msra.mxu0 0
        %1626 = vmatprep.subr.bf16.mxu0 0
        %1627 = vmatpush2.bf16.xpose.msra.mxu0 0
        %1628 = vmatprep.subr.bf16.mxu0 0
        %1629 = vmatpush2.bf16.xpose.msra.mxu0 0
        %1630 = vmatprep.subr.bf16.mxu0 0
        %1631 = vmatpush2.bf16.xpose.msra.mxu0 0
        %1632 = vmatprep.subr.bf16.mxu0 0
        %1633 = vmatpush2.bf16.xpose.msra.mxu0 0
        %1634 = vmatprep.mubr.bf16.mxu0 0
        %1635 = vmatmul.mubr.bf16.gmra.mxu0 %v1597
        %v1636 = vpop.f32.mrf.mxu0
        %v1637 = vadd.f32 0.0, %v1636
        %v1638 = vpop.f32.mrf.mxu0
        %v1639 = vpop.f32.mrf.mxu0
        %v1640 = vpop.f32.mrf.mxu0
        %1641 = vdwg.mxu0
        %v1642 = vsel %vm1222, %v1591, -1e+30
        %v1643 = vsel %vm1222, %v1637, -1e+30
        %v1644 = vsel %vm1225, %v1642, -inf
        %1645 = vmax.xlane.f32.xlu0 %v1644
        %v1646 = vpop.xlane.xlu0 %1645
        %v1647 = vsel %vm1225, %v1643, -inf
        %1648 = vmax.xlane.f32.xlu0 %v1647
        %v1649 = vpop.xlane.xlu0 %1648
        %v1650 = vsub.f32 %v1642, %v1646
        %v1651 = vsub.f32 %v1643, %v1649
        %v1652 = vmul.f32 %v1650, 1.442695
        %v1653 = vpow.pop %v1652
        %v1654 = vmul.f32 %v1651, 1.442695
        %v1655 = vpow.pop %v1654
        %v1656 = vsel %vm1225, %v1653, 0.0
        %1657 = vadd.xlane.f32.xlu0 %v1656
        %v1658 = vpop.xlane.xlu0 %1657
        %v1659 = vsel %vm1225, %v1655, 0.0
        %1660 = vadd.xlane.f32.xlu0 %v1659
        %v1661 = vpop.xlane.xlu0 %1660
        %v1662 = vrcp.pop %v1658
        %v1663 = vrcp.pop %v1661
        %v1664 = vmul.f32 %v1653, %v1662
        %v1665 = vmul.f32 %v1655, %v1663
        %v1666 = vpack.c.bf16 %v1664, %v1664
        %v1667 = vpack.c.bf16 %v1665, %v1665
        %v1668 = vpack.c.bf16 %v1540, %v1540
        %v1669 = vpack.c.bf16 %v1543, %v1543
        %v1671 = vsel %vm1225, %v1666, 0
        %v1674 = vsel %vm1255, %v1668, 0
        %1676 = vmatprep.subr.bf16.mxu0 0
        %1677 = vmatpush1.bf16.msra.mxu0 0
        %1678 = vmatprep.subr.bf16.mxu0 0
        %1679 = vmatpush1.bf16.msra.mxu0 0
        %1680 = vmatprep.subr.bf16.mxu0 0
        %1681 = vmatpush1.bf16.msra.mxu0 0
        %1682 = vmatprep.subr.bf16.mxu0 0
        %1683 = vmatpush1.bf16.msra.mxu0 0
        %1684 = vmatprep.subr.bf16.mxu0 0
        %1685 = vmatpush1.bf16.msra.mxu0 0
        %1686 = vmatprep.subr.bf16.mxu0 0
        %1687 = vmatpush1.bf16.msra.mxu0 0
        %1688 = vmatprep.subr.bf16.mxu0 0
        %1689 = vmatpush1.bf16.msra.mxu0 0
        %1690 = vmatprep.subr.bf16.mxu0 0
        %1691 = vmatpush1.bf16.msra.mxu0 %v1674
        %1692 = vmatprep.subr.bf16.mxu0 0
        %1693 = vmatpush2.bf16.msra.mxu0 0
        %1694 = vmatprep.subr.bf16.mxu0 0
        %1695 = vmatpush2.bf16.msra.mxu0 0
        %1696 = vmatprep.subr.bf16.mxu0 0
        %1697 = vmatpush2.bf16.msra.mxu0 0
        %1698 = vmatprep.subr.bf16.mxu0 0
        %1699 = vmatpush2.bf16.msra.mxu0 0
        %1700 = vmatprep.subr.bf16.mxu0 0
        %1701 = vmatpush2.bf16.msra.mxu0 0
        %1702 = vmatprep.subr.bf16.mxu0 0
        %1703 = vmatpush2.bf16.msra.mxu0 0
        %1704 = vmatprep.subr.bf16.mxu0 0
        %1705 = vmatpush2.bf16.msra.mxu0 0
        %1706 = vmatprep.subr.bf16.mxu0 0
        %1707 = vmatpush2.bf16.msra.mxu0 0
        %1708 = vmatprep.mubr.bf16.mxu0 0
        %1709 = vmatmul.mubr.bf16.gmra.mxu0 %v1671
        %v1710 = vpop.f32.mrf.mxu0
        %v1711 = vadd.f32 0.0, %v1710
        %v1712 = vpop.f32.mrf.mxu0
        %v1713 = vpop.f32.mrf.mxu0
        %v1714 = vpop.f32.mrf.mxu0
        %1715 = vdwg.mxu0
        %v1717 = vsel %vm1225, %v1667, 0
        %v1720 = vsel %vm1255, %v1669, 0
        %1722 = vmatprep.subr.bf16.mxu0 0
        %1723 = vmatpush1.bf16.msra.mxu0 0
        %1724 = vmatprep.subr.bf16.mxu0 0
        %1725 = vmatpush1.bf16.msra.mxu0 0
        %1726 = vmatprep.subr.bf16.mxu0 0
        %1727 = vmatpush1.bf16.msra.mxu0 0
        %1728 = vmatprep.subr.bf16.mxu0 0
        %1729 = vmatpush1.bf16.msra.mxu0 0
        %1730 = vmatprep.subr.bf16.mxu0 0
        %1731 = vmatpush1.bf16.msra.mxu0 0
        %1732 = vmatprep.subr.bf16.mxu0 0
        %1733 = vmatpush1.bf16.msra.mxu0 0
        %1734 = vmatprep.subr.bf16.mxu0 0
        %1735 = vmatpush1.bf16.msra.mxu0 0
        %1736 = vmatprep.subr.bf16.mxu0 0
        %1737 = vmatpush1.bf16.msra.mxu0 %v1720
        %1738 = vmatprep.subr.bf16.mxu0 0
        %1739 = vmatpush2.bf16.msra.mxu0 0
        %1740 = vmatprep.subr.bf16.mxu0 0
        %1741 = vmatpush2.bf16.msra.mxu0 0
        %1742 = vmatprep.subr.bf16.mxu0 0
        %1743 = vmatpush2.bf16.msra.mxu0 0
        %1744 = vmatprep.subr.bf16.mxu0 0
        %1745 = vmatpush2.bf16.msra.mxu0 0
        %1746 = vmatprep.subr.bf16.mxu0 0
        %1747 = vmatpush2.bf16.msra.mxu0 0
        %1748 = vmatprep.subr.bf16.mxu0 0
        %1749 = vmatpush2.bf16.msra.mxu0 0
        %1750 = vmatprep.subr.bf16.mxu0 0
        %1751 = vmatpush2.bf16.msra.mxu0 0
        %1752 = vmatprep.subr.bf16.mxu0 0
        %1753 = vmatpush2.bf16.msra.mxu0 0
        %1754 = vmatprep.mubr.bf16.mxu0 0
        %1755 = vmatmul.mubr.bf16.gmra.mxu0 %v1717
        %v1756 = vpop.f32.mrf.mxu0
        %v1757 = vadd.f32 0.0, %v1756
        %v1758 = vpop.f32.mrf.mxu0
        %v1759 = vpop.f32.mrf.mxu0
        %v1760 = vpop.f32.mrf.mxu0
        %1761 = vdwg.mxu0
        %v1762 = vpack.c.bf16 %v1757, %v1711
        %s1763 = scalar_lea.vmem %s839, 8
        %v1764 = vld [vmem:[%s1763] sm:$0xf]
        %v1765 = vld [vmem:[%s1763 + $0x4] sm:$0xf]
        %v1768 = vunpack.c.l.b16 %v1764
        %v1769 = vunpack.c.l.b16 %v1765
        %v1770 = vpack.c.b16 %v1769, %v1768
        %v1773 = vsel %vm1128, %v1762, 0
        %1775 = vmatprep.subr.bf16.mxu0 0
        %1776 = vmatpush1.bf16.msra.mxu0 0
        %1777 = vmatprep.subr.bf16.mxu0 0
        %1778 = vmatpush1.bf16.msra.mxu0 0
        %1779 = vmatprep.subr.bf16.mxu0 0
        %1780 = vmatpush1.bf16.msra.mxu0 0
        %1781 = vmatprep.subr.bf16.mxu0 0
        %1782 = vmatpush1.bf16.msra.mxu0 0
        %1783 = vmatprep.subr.bf16.mxu0 0
        %1784 = vmatpush1.bf16.msra.mxu0 0
        %1785 = vmatprep.subr.bf16.mxu0 0
        %1786 = vmatpush1.bf16.msra.mxu0 0
        %1787 = vmatprep.subr.bf16.mxu0 0
        %1788 = vmatpush1.bf16.msra.mxu0 0
        %1789 = vmatprep.subr.bf16.mxu0 0
        %1790 = vmatpush1.bf16.msra.mxu0 %v1770
        %1791 = vmatprep.subr.bf16.mxu0 0
        %1792 = vmatpush2.bf16.msra.mxu0 0
        %1793 = vmatprep.subr.bf16.mxu0 0
        %1794 = vmatpush2.bf16.msra.mxu0 0
        %1795 = vmatprep.subr.bf16.mxu0 0
        %1796 = vmatpush2.bf16.msra.mxu0 0
        %1797 = vmatprep.subr.bf16.mxu0 0
        %1798 = vmatpush2.bf16.msra.mxu0 0
        %1799 = vmatprep.subr.bf16.mxu0 0
        %1800 = vmatpush2.bf16.msra.mxu0 0
        %1801 = vmatprep.subr.bf16.mxu0 0
        %1802 = vmatpush2.bf16.msra.mxu0 0
        %1803 = vmatprep.subr.bf16.mxu0 0
        %1804 = vmatpush2.bf16.msra.mxu0 0
        %1805 = vmatprep.subr.bf16.mxu0 0
        %1806 = vmatpush2.bf16.msra.mxu0 0
        %1807 = vmatprep.mubr.bf16.mxu0 0
        %1808 = vmatmul.mubr.bf16.gmra.mxu0 %v1773
        %v1809 = vpop.f32.mrf.mxu0
        %v1810 = vadd.f32 0.0, %v1809
        %v1811 = vpop.f32.mrf.mxu0
        %v1812 = vpop.f32.mrf.mxu0
        %v1813 = vadd.f32 0.0, %v1812
        %v1814 = vpop.f32.mrf.mxu0
        %1815 = vdwg.mxu0
        %v1818 = vunpack.c.l.b16 %v1346
        %v1819 = vunpack.c.l.b16 %v1347
        %v1820 = vpack.c.b16 %v1819, %v1818
        %v1823 = vsel %vm1128, %v1345, 0
        %1825 = vmatprep.subr.bf16.mxu0 0
        %1826 = vmatpush1.bf16.msra.mxu0 0
        %1827 = vmatprep.subr.bf16.mxu0 0
        %1828 = vmatpush1.bf16.msra.mxu0 0
        %1829 = vmatprep.subr.bf16.mxu0 0
        %1830 = vmatpush1.bf16.msra.mxu0 0
        %1831 = vmatprep.subr.bf16.mxu0 0
        %1832 = vmatpush1.bf16.msra.mxu0 0
        %1833 = vmatprep.subr.bf16.mxu0 0
        %1834 = vmatpush1.bf16.msra.mxu0 0
        %1835 = vmatprep.subr.bf16.mxu0 0
        %1836 = vmatpush1.bf16.msra.mxu0 0
        %1837 = vmatprep.subr.bf16.mxu0 0
        %1838 = vmatpush1.bf16.msra.mxu0 0
        %1839 = vmatprep.subr.bf16.mxu0 0
        %1840 = vmatpush1.bf16.msra.mxu0 %v1820
        %1841 = vmatprep.subr.bf16.mxu0 0
        %1842 = vmatpush2.bf16.msra.mxu0 0
        %1843 = vmatprep.subr.bf16.mxu0 0
        %1844 = vmatpush2.bf16.msra.mxu0 0
        %1845 = vmatprep.subr.bf16.mxu0 0
        %1846 = vmatpush2.bf16.msra.mxu0 0
        %1847 = vmatprep.subr.bf16.mxu0 0
        %1848 = vmatpush2.bf16.msra.mxu0 0
        %1849 = vmatprep.subr.bf16.mxu0 0
        %1850 = vmatpush2.bf16.msra.mxu0 0
        %1851 = vmatprep.subr.bf16.mxu0 0
        %1852 = vmatpush2.bf16.msra.mxu0 0
        %1853 = vmatprep.subr.bf16.mxu0 0
        %1854 = vmatpush2.bf16.msra.mxu0 0
        %1855 = vmatprep.subr.bf16.mxu0 0
        %1856 = vmatpush2.bf16.msra.mxu0 0
        %1857 = vmatprep.mubr.bf16.mxu0 0
        %1858 = vmatmul.mubr.bf16.gmra.mxu0 %v1823
        %v1859 = vpop.f32.mrf.mxu0
        %v1860 = vadd.f32 %v1810, %v1859
        %v1861 = vpop.f32.mrf.mxu0
        %v1862 = vpop.f32.mrf.mxu0
        %v1863 = vadd.f32 %v1813, %v1862
        %v1864 = vpop.f32.mrf.mxu0
        %1865 = vdwg.mxu0
        %v1866 = vadd.f32 %v875, %v1860
        %v1867 = vadd.f32 %v876, %v1863
        %v1868 = vld [vmem:[%s842] sm:$0x1]
        %v1870 = vlaneseq
        %v1871 = vshrl.u32 %v1870, 7
        %v1872 = vsub.s32 0, %v1871
        %v1873 = vrot.slane %v1868, %v1872
        %v1875 = vadd.f32 %v1866, %v1873
        %v1876 = vadd.f32 %v1867, %v1873
        %v1877 = vld [vmem:[%s845] sm:$0x1]
        %v1878 = vld [vmem:[%s848] sm:$0x1]
        %v1879 = vsel %vm879, %v1875, 0.0
        %1880 = vadd.xlane.f32.xlu0 %v1879
        %v1881 = vpop.xlane.xlu0 %1880
        %v1882 = vsel %vm879, %v1876, 0.0
        %1883 = vadd.xlane.f32.xlu0 %v1882
        %v1884 = vpop.xlane.xlu0 %1883
        %v1885 = vmul.f32 %v1881, %v886
        %v1886 = vmul.f32 %v1884, %v886
        %v1887 = vsub.f32 %v1875, %v1885
        %v1888 = vsub.f32 %v1876, %v1886
        %v1889 = vmul.f32 %v1887, %v1887
        %v1890 = vmul.f32 %v1888, %v1888
        %v1891 = vsel %vm879, %v1889, 0.0
        %1892 = vadd.xlane.f32.xlu0 %v1891
        %v1893 = vpop.xlane.xlu0 %1892
        %v1894 = vsel %vm879, %v1890, 0.0
        %1895 = vadd.xlane.f32.xlu0 %v1894
        %v1896 = vpop.xlane.xlu0 %1895
        %v1897 = vmul.f32 %v1893, %v886
        %v1898 = vmul.f32 %v1896, %v886
        %v1899 = vadd.f32 %v1897, 1e-05
        %v1900 = vadd.f32 %v1898, 1e-05
        %v1901 = vrsqrt.pop %v1899
        %v1902 = vrsqrt.pop %v1900
        %v1903 = vmul.f32 %v1887, %v1901
        %v1904 = vmul.f32 %v1888, %v1902
        %v1906 = vlaneseq
        %v1907 = vshrl.u32 %v1906, 7
        %v1908 = vsub.s32 0, %v1907
        %v1909 = vrot.slane %v1877, %v1908
        %v1911 = vmul.f32 %v1903, %v1909
        %v1912 = vmul.f32 %v1904, %v1909
        %v1914 = vlaneseq
        %v1915 = vshrl.u32 %v1914, 7
        %v1916 = vsub.s32 0, %v1915
        %v1917 = vrot.slane %v1878, %v1916
        %v1919 = vadd.f32 %v1911, %v1917
        %v1920 = vadd.f32 %v1912, %v1917
        %v1921 = vpack.c.bf16 %v1920, %v1919
        %v1922 = vld [vmem:[%s853] sm:$0xf]
        %v1923 = vld [vmem:[%s853 + $0x4] sm:$0xf]
        %v1924 = vld [vmem:[%s853 + $0x8] sm:$0xf]
        %v1925 = vld [vmem:[%s853 + $0xc] sm:$0xf]
        %v1926 = vld [vmem:[%s856] sm:$0x1]
        %v1928 = vlaneseq
        %v1929 = vshrl.u32 %v1928, 7
        %v1930 = vsub.s32 0, %v1929
        %v1931 = vrot.slane %v1926, %v1930
        %v1937 = vunpack.c.l.b16 %v1922
        %v1938 = vunpack.c.l.b16 %v1923
        %v1939 = vunpack.c.l.b16 %v1924
        %v1940 = vunpack.c.l.b16 %v1925
        %v1941 = vpack.c.b16 %v1938, %v1937
        %v1942 = vpack.c.b16 %v1940, %v1939
        %v1946 = vsel %vm879, %v1921, 0
        %1948 = vmatprep.subr.bf16.mxu0 0
        %1949 = vmatpush1.bf16.msra.mxu0 0
        %1950 = vmatprep.subr.bf16.mxu0 0
        %1951 = vmatpush1.bf16.msra.mxu0 0
        %1952 = vmatprep.subr.bf16.mxu0 0
        %1953 = vmatpush1.bf16.msra.mxu0 0
        %1954 = vmatprep.subr.bf16.mxu0 0
        %1955 = vmatpush1.bf16.msra.mxu0 0
        %1956 = vmatprep.subr.bf16.mxu0 0
        %1957 = vmatpush1.bf16.msra.mxu0 0
        %1958 = vmatprep.subr.bf16.mxu0 0
        %1959 = vmatpush1.bf16.msra.mxu0 0
        %1960 = vmatprep.subr.bf16.mxu0 0
        %1961 = vmatpush1.bf16.msra.mxu0 %v1942
        %1962 = vmatprep.subr.bf16.mxu0 0
        %1963 = vmatpush1.bf16.msra.mxu0 %v1941
        %1964 = vmatprep.subr.bf16.mxu0 0
        %1965 = vmatpush2.bf16.msra.mxu0 0
        %1966 = vmatprep.subr.bf16.mxu0 0
        %1967 = vmatpush2.bf16.msra.mxu0 0
        %1968 = vmatprep.subr.bf16.mxu0 0
        %1969 = vmatpush2.bf16.msra.mxu0 0
        %1970 = vmatprep.subr.bf16.mxu0 0
        %1971 = vmatpush2.bf16.msra.mxu0 0
        %1972 = vmatprep.subr.bf16.mxu0 0
        %1973 = vmatpush2.bf16.msra.mxu0 0
        %1974 = vmatprep.subr.bf16.mxu0 0
        %1975 = vmatpush2.bf16.msra.mxu0 0
        %1976 = vmatprep.subr.bf16.mxu0 0
        %1977 = vmatpush2.bf16.msra.mxu0 0
        %1978 = vmatprep.subr.bf16.mxu0 0
        %1979 = vmatpush2.bf16.msra.mxu0 0
        %1980 = vmatprep.mubr.bf16.mxu0 0
        %1981 = vmatmul.mubr.bf16.gmra.mxu0 %v1946
        %v1982 = vpop.f32.mrf.mxu0
        %v1983 = vadd.f32 %v1931, %v1982
        %v1984 = vpop.f32.mrf.mxu0
        %v1985 = vpop.f32.mrf.mxu0
        %v1986 = vadd.f32 %v1931, %v1985
        %v1987 = vpop.f32.mrf.mxu0
        %1988 = vdwg.mxu0
        %v1989 = vmul.f32 %v1983, 0.5
        %v1990 = vmul.f32 %v1986, 0.5
        %v1991 = vmul.f32 %v1983, 0.044715
        %v1992 = vmul.f32 %v1986, 0.044715
        %v1993 = vmul.f32 %v1991, %v1983
        %v1994 = vmul.f32 %v1992, %v1986
        %v1995 = vmul.f32 %v1993, %v1983
        %v1996 = vmul.f32 %v1994, %v1986
        %v1997 = vadd.f32 %v1983, %v1995
        %v1998 = vadd.f32 %v1986, %v1996
        %v1999 = vmul.f32 %v1997, 0.7978846
        %v2000 = vmul.f32 %v1998, 0.7978846
        %v2001 = vtanh.pop %v1999
        %v2002 = vtanh.pop %v2000
        %v2003 = vadd.f32 %v2001, 1.0
        %v2004 = vadd.f32 %v2002, 1.0
        %v2005 = vmul.f32 %v1989, %v2003
        %v2006 = vmul.f32 %v1990, %v2004
        %v2007 = vpack.c.bf16 %v2006, %v2005
        %v2008 = vld [vmem:[%s861] sm:$0xf]
        %v2009 = vld [vmem:[%s861 + $0x4] sm:$0xf]
        %v2010 = vld [vmem:[%s861 + $0x8] sm:$0xf]
        %v2011 = vld [vmem:[%s861 + $0xc] sm:$0xf]
        %v2012 = vld [vmem:[%s861 + $0x10] sm:$0xf]
        %v2013 = vld [vmem:[%s861 + $0x14] sm:$0xf]
        %v2014 = vld [vmem:[%s861 + $0x18] sm:$0xf]
        %v2015 = vld [vmem:[%s861 + $0x1c] sm:$0xf]
        %v2016 = vld [vmem:[%s861 + $0x20] sm:$0xf]
        %v2017 = vld [vmem:[%s861 + $0x24] sm:$0xf]
        %v2018 = vld [vmem:[%s861 + $0x28] sm:$0xf]
        %v2019 = vld [vmem:[%s861 + $0x2c] sm:$0xf]
        %v2020 = vld [vmem:[%s861 + $0x30] sm:$0xf]
        %v2021 = vld [vmem:[%s861 + $0x34] sm:$0xf]
        %v2022 = vld [vmem:[%s861 + $0x38] sm:$0xf]
        %v2023 = vld [vmem:[%s861 + $0x3c] sm:$0xf]
        %v2040 = vunpack.c.l.b16 %v2008
        %v2041 = vunpack.c.l.b16 %v2009
        %v2042 = vunpack.c.l.b16 %v2010
        %v2043 = vunpack.c.l.b16 %v2011
        %v2044 = vunpack.c.l.b16 %v2012
        %v2045 = vunpack.c.l.b16 %v2013
        %v2046 = vunpack.c.l.b16 %v2014
        %v2047 = vunpack.c.l.b16 %v2015
        %v2048 = vunpack.c.l.b16 %v2016
        %v2049 = vunpack.c.l.b16 %v2017
        %v2050 = vunpack.c.l.b16 %v2018
        %v2051 = vunpack.c.l.b16 %v2019
        %v2052 = vunpack.c.l.b16 %v2020
        %v2053 = vunpack.c.l.b16 %v2021
        %v2054 = vunpack.c.l.b16 %v2022
        %v2055 = vunpack.c.l.b16 %v2023
        %v2056 = vpack.c.b16 %v2041, %v2040
        %v2057 = vpack.c.b16 %v2043, %v2042
        %v2058 = vpack.c.b16 %v2045, %v2044
        %v2059 = vpack.c.b16 %v2047, %v2046
        %v2060 = vpack.c.b16 %v2049, %v2048
        %v2061 = vpack.c.b16 %v2051, %v2050
        %v2062 = vpack.c.b16 %v2053, %v2052
        %v2063 = vpack.c.b16 %v2055, %v2054
        %2072 = vmatprep.subr.bf16.mxu0 0
        %2073 = vmatpush1.bf16.msra.mxu0 %v2063
        %2074 = vmatprep.subr.bf16.mxu0 0
        %2075 = vmatpush1.bf16.msra.mxu0 %v2062
        %2076 = vmatprep.subr.bf16.mxu0 0
        %2077 = vmatpush1.bf16.msra.mxu0 %v2061
        %2078 = vmatprep.subr.bf16.mxu0 0
        %2079 = vmatpush1.bf16.msra.mxu0 %v2060
        %2080 = vmatprep.subr.bf16.mxu0 0
        %2081 = vmatpush1.bf16.msra.mxu0 %v2059
        %2082 = vmatprep.subr.bf16.mxu0 0
        %2083 = vmatpush1.bf16.msra.mxu0 %v2058
        %2084 = vmatprep.subr.bf16.mxu0 0
        %2085 = vmatpush1.bf16.msra.mxu0 %v2057
        %2086 = vmatprep.subr.bf16.mxu0 0
        %2087 = vmatpush1.bf16.msra.mxu0 %v2056
        %2088 = vmatprep.subr.bf16.mxu0 0
        %2089 = vmatpush2.bf16.msra.mxu0 0
        %2090 = vmatprep.subr.bf16.mxu0 0
        %2091 = vmatpush2.bf16.msra.mxu0 0
        %2092 = vmatprep.subr.bf16.mxu0 0
        %2093 = vmatpush2.bf16.msra.mxu0 0
        %2094 = vmatprep.subr.bf16.mxu0 0
        %2095 = vmatpush2.bf16.msra.mxu0 0
        %2096 = vmatprep.subr.bf16.mxu0 0
        %2097 = vmatpush2.bf16.msra.mxu0 0
        %2098 = vmatprep.subr.bf16.mxu0 0
        %2099 = vmatpush2.bf16.msra.mxu0 0
        %2100 = vmatprep.subr.bf16.mxu0 0
        %2101 = vmatpush2.bf16.msra.mxu0 0
        %2102 = vmatprep.subr.bf16.mxu0 0
        %2103 = vmatpush2.bf16.msra.mxu0 0
        %2104 = vmatprep.mubr.bf16.mxu0 0
        %2105 = vmatmul.mubr.bf16.gmra.mxu0 %v2007
        %v2106 = vpop.f32.mrf.mxu0
        %v2107 = vadd.f32 0.0, %v2106
        %v2108 = vpop.f32.mrf.mxu0
        %v2109 = vpop.f32.mrf.mxu0
        %v2110 = vadd.f32 0.0, %v2109
        %v2111 = vpop.f32.mrf.mxu0
        %2112 = vdwg.mxu0
        %v2113 = vadd.f32 %v1875, %v2107
        %v2114 = vadd.f32 %v1876, %v2110
        %v2115 = vld [vmem:[%s864] sm:$0x1]
        %v2117 = vlaneseq
        %v2118 = vshrl.u32 %v2117, 7
        %v2119 = vsub.s32 0, %v2118
        %v2120 = vrot.slane %v2115, %v2119
        %v2122 = vadd.f32 %v2113, %v2120
        %v2123 = vadd.f32 %v2114, %v2120
        %2124 = vst.msk [vmem:[#allocation2] sm:$0xff] %vm879, %v2122
        %2125 = vst.msk [vmem:[#allocation2 + $0x8] sm:$0xff] %vm879, %v2123
        %p2126 = scmp.eq.s32.totalorder %s32, 1
        // Predicated region
        $region105: #{gpt_forward.1} parent=99 // pred_check
          %p2127 = pneg %p2126
        $region106: #{gpt_forward.1} parent=99 // pred_check_branch
          %2129 = sbr.rel (%p2127) target = $region108
        $region107: #{gpt_forward.1} parent=99 // pred_region
          %v2130 = vld [vmem:[%s17] sm:$0x1]
          %v2131 = vld [vmem:[%s18] sm:$0x1]
          %v2132 = vsel %vm879, %v2122, 0.0
          %2133 = vadd.xlane.f32.xlu0 %v2132
          %v2134 = vpop.xlane.xlu0 %2133
          %v2135 = vsel %vm879, %v2123, 0.0
          %2136 = vadd.xlane.f32.xlu0 %v2135
          %v2137 = vpop.xlane.xlu0 %2136
          %v2138 = vmul.f32 %v2134, %v886
          %v2139 = vmul.f32 %v2137, %v886
          %v2140 = vsub.f32 %v2122, %v2138
          %v2141 = vsub.f32 %v2123, %v2139
          %v2142 = vmul.f32 %v2140, %v2140
          %v2143 = vmul.f32 %v2141, %v2141
          %v2144 = vsel %vm879, %v2142, 0.0
          %2145 = vadd.xlane.f32.xlu0 %v2144
          %v2146 = vpop.xlane.xlu0 %2145
          %v2147 = vsel %vm879, %v2143, 0.0
          %2148 = vadd.xlane.f32.xlu0 %v2147
          %v2149 = vpop.xlane.xlu0 %2148
          %v2150 = vmul.f32 %v2146, %v886
          %v2151 = vmul.f32 %v2149, %v886
          %v2152 = vadd.f32 %v2150, 1e-05
          %v2153 = vadd.f32 %v2151, 1e-05
          %v2154 = vrsqrt.pop %v2152
          %v2155 = vrsqrt.pop %v2153
          %v2156 = vmul.f32 %v2140, %v2154
          %v2157 = vmul.f32 %v2141, %v2155
          %v2159 = vlaneseq
          %v2160 = vshrl.u32 %v2159, 7
          %v2161 = vsub.s32 0, %v2160
          %v2162 = vrot.slane %v2130, %v2161
          %v2164 = vmul.f32 %v2156, %v2162
          %v2165 = vmul.f32 %v2157, %v2162
          %v2167 = vlaneseq
          %v2168 = vshrl.u32 %v2167, 7
          %v2169 = vsub.s32 0, %v2168
          %v2170 = vrot.slane %v2131, %v2169
          %v2172 = vadd.f32 %v2164, %v2170
          %v2173 = vadd.f32 %v2165, %v2170
          %v2174 = vpack.c.bf16 %v2173, %v2172
          %v2175 = vld [vmem:[%s19] sm:$0xff]
          %v2176 = vld [vmem:[%s19 + $0x8] sm:$0xff]
          %v2177 = vld [vmem:[%s19 + $0x10] sm:$0xff]
          %v2178 = vld [vmem:[%s19 + $0x18] sm:$0xff]
          %v2183 = vunpack.c.l.b16 %v2175
          %v2184 = vunpack.c.h.b16 %v2175
          %v2185 = vunpack.c.l.b16 %v2176
          %v2186 = vunpack.c.h.b16 %v2176
          %v2187 = vunpack.c.l.b16 %v2177
          %v2188 = vunpack.c.h.b16 %v2177
          %v2189 = vunpack.c.l.b16 %v2178
          %v2190 = vunpack.c.h.b16 %v2178
          %v2191 = vpack.c.b16 %v2185, %v2183
          %v2192 = vpack.c.b16 %v2186, %v2184
          %v2193 = vpack.c.b16 %v2189, %v2187
          %v2194 = vpack.c.b16 %v2190, %v2188
          %v2200 = vsel %vm879, %v2174, 0
          %2202 = vmatprep.subr.bf16.mxu0 0
          %2203 = vmatpush1.bf16.msra.mxu0 0
          %2204 = vmatprep.subr.bf16.mxu0 0
          %2205 = vmatpush1.bf16.msra.mxu0 0
          %2206 = vmatprep.subr.bf16.mxu0 0
          %2207 = vmatpush1.bf16.msra.mxu0 0
          %2208 = vmatprep.subr.bf16.mxu0 0
          %2209 = vmatpush1.bf16.msra.mxu0 0
          %2210 = vmatprep.subr.bf16.mxu0 0
          %2211 = vmatpush1.bf16.msra.mxu0 0
          %2212 = vmatprep.subr.bf16.mxu0 0
          %2213 = vmatpush1.bf16.msra.mxu0 0
          %2214 = vmatprep.subr.bf16.mxu0 %v2194
          %2215 = vmatpush1.bf16.msra.mxu0 %v2193
          %2216 = vmatprep.subr.bf16.mxu0 %v2192
          %2217 = vmatpush1.bf16.msra.mxu0 %v2191
          %2218 = vmatprep.subr.bf16.mxu0 0
          %2219 = vmatpush2.bf16.msra.mxu0 0
          %2220 = vmatprep.subr.bf16.mxu0 0
          %2221 = vmatpush2.bf16.msra.mxu0 0
          %2222 = vmatprep.subr.bf16.mxu0 0
          %2223 = vmatpush2.bf16.msra.mxu0 0
          %2224 = vmatprep.subr.bf16.mxu0 0
          %2225 = vmatpush2.bf16.msra.mxu0 0
          %2226 = vmatprep.subr.bf16.mxu0 0
          %2227 = vmatpush2.bf16.msra.mxu0 0
          %2228 = vmatprep.subr.bf16.mxu0 0
          %2229 = vmatpush2.bf16.msra.mxu0 0
          %2230 = vmatprep.subr.bf16.mxu0 0
          %2231 = vmatpush2.bf16.msra.mxu0 0
          %2232 = vmatprep.subr.bf16.mxu0 0
          %2233 = vmatpush2.bf16.msra.mxu0 0
          %2234 = vmatprep.mubr.bf16.mxu0 0
          %2235 = vmatmul.mubr.bf16.gmra.mxu0 %v2200
          %v2236 = vpop.f32.mrf.mxu0
          %v2237 = vadd.f32 0.0, %v2236
          %v2238 = vpop.f32.mrf.mxu0
          %v2239 = vadd.f32 0.0, %v2238
          %v2240 = vpop.f32.mrf.mxu0
          %v2241 = vadd.f32 0.0, %v2240
          %v2242 = vpop.f32.mrf.mxu0
          %v2243 = vadd.f32 0.0, %v2242
          %2244 = vdwg.mxu0
          %2245 = vst [vmem:[#allocation3] sm:$0xff] %v2237
          %2246 = vst [vmem:[#allocation3 + $0x8] sm:$0xff] %v2239
          %2247 = vst [vmem:[#allocation3 + $0x10] sm:$0xff] %v2241
          %2248 = vst [vmem:[#allocation3 + $0x18] sm:$0xff] %v2243
        $region108: #{gpt_forward.1} parent=99 // pred_fallthru
          _
        // Predicated region
        $region109: #{gpt_forward.1} parent=99 // pred_check
          %p2249 = pneg %p545
        $region110: #{gpt_forward.1} parent=99 // pred_check_branch
          %2251 = sbr.rel (%p2249) target = $region112
        $region111: #{gpt_forward.1} parent=99 // pred_region
          %s2253 = ssub.s32 512, 512
          %2254 = vsyncadd [#allocation4], %s2253
          %s2255 = sshll.u32 [#allocation3], 4
          %s2256 = int_to_ptr.vmem [resolvable:$true] %s2255
          %2261 = dma.vmem_to_hbm [thread:$0]  %s2256, 512, %s20, [#allocation4], 256, 256, 16
        $region112: #{gpt_forward.1} parent=99 // pred_fallthru
          _
        // Predicated region
        $region113: #{gpt_forward.1} parent=99 // pred_check
          %p2262 = pneg %p545
        $region114: #{gpt_forward.1} parent=99 // pred_check_branch
          %2264 = sbr.rel (%p2262) target = $region116
        $region115: #{gpt_forward.1} parent=99 // pred_region
          %2265 = dma.done [#allocation4], 512
        $region116: #{gpt_forward.1} parent=99 // pred_fallthru
          _
      $region100: #{gpt_forward.1} parent=5 // pred_fallthru
        _
      %p2266 = scmp.le.s32.totalorder 2, %s27
      // Predicated region
      $region117: #{gpt_forward.1} parent=5 // pred_check
        %p2267 = pneg %p2266
      $region118: #{gpt_forward.1} parent=5 // pred_check_branch
        %2269 = sbr.rel (%p2267) target = $region120
      $region119: #{gpt_forward.1} parent=5 // pred_region
        %s2270 = ssub.s32 %s27, 2
      $region120: #{gpt_forward.1} parent=5 // pred_fallthru
        _
    $region6: #{gpt_forward.1} parent=1 // loop_footer
      %s31 = sadd.s32 1, %s27
    $region7: #{gpt_forward.1} parent=1 // loop_footer_branch
      %26 = sbr.rel target = $region3
    $region8: #{gpt_forward.1} parent=1 // loop_exit
      _
    %2271 = vsyncpa [#allocation4], 1
    %s2272 = scalar_lea.sflag [#allocation4], 1
    %2273 = vsyncpa %s2272, 1

</llo_original>
